<compile_context>
chip_gen: v7x
topology: tpu7x:2x2x1
jax: 0.10.0
libtpu: 0.0.40
codegen_flags: <defaults>
</compile_context>

<pallas_src>
import functools

import jax
import jax.numpy as jnp
from jax.experimental import pallas as pl
from jax.experimental.pallas import tpu as pltpu

H = 32        # LSTM hidden size = (num_layers * channels) // 2 = (4 * 16) // 2
C_PAD = 128   # lane-dense padded class dimension for the kernel output


# ----------------------------------------------------------------------------
# Fused Pallas kernel
# ----------------------------------------------------------------------------
def gcn_jknet_kernel(a_ref, x_ref,
                     w1_ref, b1_ref, w2_ref, b2_ref,
                     wih_f_ref, whh_f_ref, b_f_ref,
                     wih_r_ref, whh_r_ref, b_r_ref,
                     attw_f_ref, attw_r_ref, attb_ref,
                     wl_ref, bl_ref,
                     o_ref, *, num_classes):
    f32 = jnp.float32
    bf16 = jnp.bfloat16

    a = a_ref[...]                                    # [N, N] bf16 normalized adjacency

    # ---------------- GCN layer 1: relu((A @ X) @ W1 + b1) -----------------
    # F_in (8) < 16, so aggregate first -> smaller N^2-scale matmul.
    x_in = x_ref[...].astype(bf16)
    ax = jnp.dot(a, x_in, preferred_element_type=f32)                         # [N, F_in]
    x1 = jnp.maximum(
        jnp.dot(ax, w1_ref[...], preferred_element_type=f32) + b1_ref[...], 0.0)   # [N, 16]

    # ---------------- GCN layer 2: relu(A @ (x1 @ W2) + b2) ----------------
    x1w = jnp.dot(x1, w2_ref[...], preferred_element_type=f32)                # [N, 16]
    x2 = jnp.maximum(
        jnp.dot(a, x1w.astype(bf16), preferred_element_type=f32) + b2_ref[...], 0.0)

    # ------------- JumpingKnowledge('lstm') over the sequence [x1, x2] ------
    wih_f = wih_f_ref[...]; whh_f = whh_f_ref[...]; b_f = b_f_ref[...]
    wih_r = wih_r_ref[...]; whh_r = whh_r_ref[...]; b_r = b_r_ref[...]

    def gates(pre):
        # Gate columns are laid out (i, f, o | g) along the 4H = 128 lanes so
        # the three sigmoid gates are one contiguous 96-lane push and tanh one
        # 32-lane push.
        sig = jax.nn.sigmoid(pre[:, 0:3 * H])
        i_g = sig[:, 0:H]
        f_g = sig[:, H:2 * H]
        o_g = sig[:, 2 * H:3 * H]
        g_g = jnp.tanh(pre[:, 3 * H:4 * H])
        return i_g, f_g, o_g, g_g

    def cell_first(x_t, wih, b):
        # h_prev == c_prev == 0: skip the recurrent matmul and f*c_prev term.
        i_g, _, o_g, g_g = gates(
            jnp.dot(x_t, wih, preferred_element_type=f32) + b)
        c = i_g * g_g
        return o_g * jnp.tanh(c), c

    def cell(x_t, h_prev, c_prev, wih, whh, b):
        pre = (jnp.dot(x_t, wih, preferred_element_type=f32)
               + jnp.dot(h_prev, whh, preferred_element_type=f32) + b)
        i_g, f_g, o_g, g_g = gates(pre)
        c = f_g * c_prev + i_g * g_g
        return o_g * jnp.tanh(c), c

    # forward direction over [x1, x2]
    h_f1, c_f1 = cell_first(x1, wih_f, b_f)                 # output at position 0
    h_f2, _ = cell(x2, h_f1, c_f1, wih_f, whh_f, b_f)       # output at position 1
    # reverse direction over [x2, x1]
    h_r1, c_r1 = cell_first(x2, wih_r, b_r)                 # output at position 1
    h_r0, _ = cell(x1, h_r1, c_r1, wih_r, whh_r, b_r)       # output at position 0

    # attention Linear(2H, 1) as VPU multiply + lane reduction (both positions)
    attw_f = attw_f_ref[...]                                # [1, H]
    attw_r = attw_r_ref[...]                                # [1, H]
    attb = attb_ref[...]                                    # [1, 1]
    a0 = jnp.sum(h_f1 * attw_f + h_r0 * attw_r, axis=1, keepdims=True) + attb
    a1 = jnp.sum(h_f2 * attw_f + h_r1 * attw_r, axis=1, keepdims=True) + attb

    # softmax over the 2 layer positions, weighted sum of [x1, x2]
    m = jnp.maximum(a0, a1)
    e0 = jnp.exp(a0 - m)
    e1 = jnp.exp(a1 - m)
    inv = pl.reciprocal(e0 + e1, approx=True)
    xj = x1 * (e0 * inv) + x2 * (e1 * inv)                  # [N, 16]

    # ---------------- APPNP(K=1, alpha=0) + Linear + log_softmax ------------
    xp = jnp.dot(a, xj.astype(bf16), preferred_element_type=f32)              # [N, 16]
    logits = (jnp.dot(xp, wl_ref[...], preferred_element_type=f32)
              + bl_ref[...])                                                  # [N, C_PAD]

    # numerically-stable log_softmax over the real classes only (padded
    # columns are ignored and sliced off outside the kernel)
    col = jax.lax.broadcasted_iota(jnp.int32, logits.shape, 1)
    valid = col < num_classes
    lmax = jnp.max(jnp.where(valid, logits, jnp.float32(-1e30)),
                   axis=1, keepdims=True)
    z = logits - lmax
    lse = jnp.log(jnp.sum(jnp.where(valid, jnp.exp(z), 0.0),
                          axis=1, keepdims=True))
    o_ref[...] = z - lse


# ----------------------------------------------------------------------------
# pallas_call wrapper (single fused call, full-array blocks: N, F are small)
# ----------------------------------------------------------------------------
def _full_spec(shape):
    ndim = len(shape)
    return pl.BlockSpec(shape, lambda i, _n=ndim: (0,) * _n)


def gcn_jknet_forward(params, x, a_hat):
    n = a_hat.shape[0]
    f_in = x.shape[1]
    num_classes = params['Wl'].shape[1]

    # pad the class dimension to a lane-dense 128 (zero extra weight columns)
    wl_pad = jnp.zeros((16, C_PAD), jnp.float32).at[:, :num_classes].set(params['Wl'])
    bl_pad = jnp.zeros((1, C_PAD), jnp.float32).at[:, :num_classes].set(params['bl'])

    a_bf = a_hat.astype(jnp.bfloat16)     # bf16 operand for all N^2-scale matmuls

    in_shapes = [
        (n, n), (n, f_in),
        (f_in, 16), (1, 16), (16, 16), (1, 16),
        (16, 4 * H), (H, 4 * H), (1, 4 * H),
        (16, 4 * H), (H, 4 * H), (1, 4 * H),
        (1, H), (1, H), (1, 1),
        (16, C_PAD), (1, C_PAD),
    ]

    out_pad = pl.pallas_call(
        functools.partial(gcn_jknet_kernel, num_classes=num_classes),
        grid=(1,),
        in_specs=[_full_spec(s) for s in in_shapes],
        out_specs=_full_spec((n, C_PAD)),
        out_shape=jax.ShapeDtypeStruct((n, C_PAD), jnp.float32),
        compiler_params=pltpu.CompilerParams(
            dimension_semantics=("arbitrary",)),
    )(a_bf, x,
      params['W1'], params['b1'], params['W2'], params['b2'],
      params['wih_f'], params['whh_f'], params['b_f'],
      params['wih_r'], params['whh_r'], params['b_r'],
      params['attw_f'], params['attw_r'], params['attb'],
      wl_pad, bl_pad)

    return out_pad[:, :num_classes]


# ----------------------------------------------------------------------------
# Model glue: parameter init + dense GCN normalization
# ----------------------------------------------------------------------------
def init_params(key, in_channels, out_channels):
    ks = jax.random.split(key, 12)
    s = 0.1
    return {
        'W1': s * jax.random.normal(ks[0], (in_channels, 16), jnp.float32),
        'b1': jnp.zeros((1, 16), jnp.float32),
        'W2': s * jax.random.normal(ks[1], (16, 16), jnp.float32),
        'b2': jnp.zeros((1, 16), jnp.float32),
        'Wl': s * jax.random.normal(ks[2], (16, out_channels), jnp.float32),
        'bl': jnp.zeros((1, out_channels), jnp.float32),
        # bidirectional LSTM, input=16, hidden=H, gate column order (i, f, o, g)
        # (b = b_ih + b_hh folded together)
        'wih_f': s * jax.random.normal(ks[3], (16, 4 * H), jnp.float32),
        'whh_f': s * jax.random.normal(ks[4], (H, 4 * H), jnp.float32),
        'b_f': s * jax.random.normal(ks[5], (1, 4 * H), jnp.float32),
        'wih_r': s * jax.random.normal(ks[6], (16, 4 * H), jnp.float32),
        'whh_r': s * jax.random.normal(ks[7], (H, 4 * H), jnp.float32),
        'b_r': s * jax.random.normal(ks[8], (1, 4 * H), jnp.float32),
        # attention Linear(2H, 1) stored as forward/reverse row vectors
        'attw_f': s * jax.random.normal(ks[9], (1, H), jnp.float32),
        'attw_r': s * jax.random.normal(ks[10], (1, H), jnp.float32),
        'attb': jnp.zeros((1, 1), jnp.float32),
    }


def gcn_norm_dense(adj):
    # A_hat = D^-1/2 (A + I) D^-1/2  (self-loops already present in adj)
    deg = jnp.sum(adj, axis=1)
    dinv = 1.0 / jnp.sqrt(jnp.maximum(deg, 1.0))
    return adj * dinv[:, None] * dinv[None, :]


if __name__ == "__main__":
    N = 64            # number of graph nodes
    IN_FEATS = 8      # dataset.num_features
    NUM_CLASSES = 4   # dataset.num_classes

    key = jax.random.PRNGKey(0)
    k_adj, k_x, k_par = jax.random.split(key, 3)

    # deterministic small random undirected graph with self-loops
    rand = jax.random.uniform(k_adj, (N, N))
    adj = (rand < 0.05).astype(jnp.float32)
    adj = jnp.maximum(adj, adj.T)
    adj = adj * (1.0 - jnp.eye(N, dtype=jnp.float32)) + jnp.eye(N, dtype=jnp.float32)
    a_hat = gcn_norm_dense(adj)

    x = jax.random.normal(k_x, (N, IN_FEATS), jnp.float32)
    params = init_params(k_par, IN_FEATS, NUM_CLASSES)

    out = gcn_jknet_forward(params, x, a_hat)
    out = jax.block_until_ready(out)

    assert out.shape == (N, NUM_CLASSES)
    # rows of log_softmax must exponentiate-sum to 1
    assert bool(jnp.allclose(jnp.sum(jnp.exp(out), axis=1), 1.0, atol=1e-4))
    print("KERNEL_OK")
</pallas_src>

<mosaic_0001>
module attributes {stable_mosaic.version = 11 : i64} {
  func.func @gcn_jknet_kernel(%arg0: i32, %arg1: memref<64x64xbf16, #tpu.memory_space<vmem>>, %arg2: memref<64x8xf32, #tpu.memory_space<vmem>>, %arg3: memref<8x16xf32, #tpu.memory_space<vmem>>, %arg4: memref<1x16xf32, #tpu.memory_space<vmem>>, %arg5: memref<16x16xf32, #tpu.memory_space<vmem>>, %arg6: memref<1x16xf32, #tpu.memory_space<vmem>>, %arg7: memref<16x128xf32, #tpu.memory_space<vmem>>, %arg8: memref<32x128xf32, #tpu.memory_space<vmem>>, %arg9: memref<1x128xf32, #tpu.memory_space<vmem>>, %arg10: memref<16x128xf32, #tpu.memory_space<vmem>>, %arg11: memref<32x128xf32, #tpu.memory_space<vmem>>, %arg12: memref<1x128xf32, #tpu.memory_space<vmem>>, %arg13: memref<1x32xf32, #tpu.memory_space<vmem>>, %arg14: memref<1x32xf32, #tpu.memory_space<vmem>>, %arg15: memref<1x1xf32, #tpu.memory_space<vmem>>, %arg16: memref<16x128xf32, #tpu.memory_space<vmem>>, %arg17: memref<1x128xf32, #tpu.memory_space<vmem>>, %arg18: memref<64x128xf32, #tpu.memory_space<vmem>>) attributes {dimension_semantics = [#tpu.dimension_semantics<arbitrary>], iteration_bounds = array<i64: 1>, scalar_prefetch = 0 : i64, scratch_operands = 0 : i64, tpu.core_type = #tpu.core_type<tc>, window_params = [{pipeline_mode = #tpu.pipeline_mode<synchronous>, transform_indices = @transform_0, window_bounds = array<i64: 64, 64>}, {pipeline_mode = #tpu.pipeline_mode<synchronous>, transform_indices = @transform_1, window_bounds = array<i64: 64, 8>}, {pipeline_mode = #tpu.pipeline_mode<synchronous>, transform_indices = @transform_2, window_bounds = array<i64: 8, 16>}, {pipeline_mode = #tpu.pipeline_mode<synchronous>, transform_indices = @transform_3, window_bounds = array<i64: 1, 16>}, {pipeline_mode = #tpu.pipeline_mode<synchronous>, transform_indices = @transform_4, window_bounds = array<i64: 16, 16>}, {pipeline_mode = #tpu.pipeline_mode<synchronous>, transform_indices = @transform_5, window_bounds = array<i64: 1, 16>}, {pipeline_mode = #tpu.pipeline_mode<synchronous>, transform_indices = @transform_6, window_bounds = array<i64: 16, 128>}, {pipeline_mode = #tpu.pipeline_mode<synchronous>, transform_indices = @transform_7, window_bounds = array<i64: 32, 128>}, {pipeline_mode = #tpu.pipeline_mode<synchronous>, transform_indices = @transform_8, window_bounds = array<i64: 1, 128>}, {pipeline_mode = #tpu.pipeline_mode<synchronous>, transform_indices = @transform_9, window_bounds = array<i64: 16, 128>}, {pipeline_mode = #tpu.pipeline_mode<synchronous>, transform_indices = @transform_10, window_bounds = array<i64: 32, 128>}, {pipeline_mode = #tpu.pipeline_mode<synchronous>, transform_indices = @transform_11, window_bounds = array<i64: 1, 128>}, {pipeline_mode = #tpu.pipeline_mode<synchronous>, transform_indices = @transform_12, window_bounds = array<i64: 1, 32>}, {pipeline_mode = #tpu.pipeline_mode<synchronous>, transform_indices = @transform_13, window_bounds = array<i64: 1, 32>}, {pipeline_mode = #tpu.pipeline_mode<synchronous>, transform_indices = @transform_14, window_bounds = array<i64: 1, 1>}, {pipeline_mode = #tpu.pipeline_mode<synchronous>, transform_indices = @transform_15, window_bounds = array<i64: 16, 128>}, {pipeline_mode = #tpu.pipeline_mode<synchronous>, transform_indices = @transform_16, window_bounds = array<i64: 1, 128>}, {pipeline_mode = #tpu.pipeline_mode<synchronous>, transform_indices = @transform_17, window_bounds = array<i64: 64, 128>}]} {
    %c0 = arith.constant 0 : index
    %c0_0 = arith.constant 0 : index
    %0 = vector.load %arg1[%c0, %c0_0] : memref<64x64xbf16, #tpu.memory_space<vmem>>, vector<64x64xbf16>
    %c0_1 = arith.constant 0 : index
    %c0_2 = arith.constant 0 : index
    %1 = vector.load %arg2[%c0_1, %c0_2] : memref<64x8xf32, #tpu.memory_space<vmem>>, vector<64x8xf32>
    %2 = arith.truncf %1 : vector<64x8xf32> to vector<64x8xbf16>
    %cst = arith.constant dense<0.000000e+00> : vector<64x8xf32>
    %3 = tpu.matmul %0, %2, %cst {dimension_numbers = #tpu.dot_dimension_numbers<[1], [0], [0], [1], [0, 0, 1, 1], [], []>} : vector<64x64xbf16>, vector<64x8xbf16>, vector<64x8xf32> -> vector<64x8xf32>
    %c0_3 = arith.constant 0 : index
    %c0_4 = arith.constant 0 : index
    %4 = vector.load %arg3[%c0_3, %c0_4] : memref<8x16xf32, #tpu.memory_space<vmem>>, vector<8x16xf32>
    %cst_5 = arith.constant dense<0.000000e+00> : vector<64x16xf32>
    %5 = tpu.matmul %3, %4, %cst_5 {dimension_numbers = #tpu.dot_dimension_numbers<[1], [0], [0], [1], [0, 0, 1, 1], [], []>} : vector<64x8xf32>, vector<8x16xf32>, vector<64x16xf32> -> vector<64x16xf32>
    %c0_6 = arith.constant 0 : index
    %c0_7 = arith.constant 0 : index
    %6 = vector.load %arg4[%c0_6, %c0_7] : memref<1x16xf32, #tpu.memory_space<vmem>>, vector<1x16xf32>
    %7 = vector.broadcast %6 : vector<1x16xf32> to vector<64x16xf32>
    %8 = arith.addf %5, %7 : vector<64x16xf32>
    %cst_8 = arith.constant 0.000000e+00 : f32
    %9 = vector.broadcast %cst_8 : f32 to vector<64x16xf32>
    %10 = arith.maximumf %8, %9 : vector<64x16xf32>
    %c0_9 = arith.constant 0 : index
    %c0_10 = arith.constant 0 : index
    %11 = vector.load %arg5[%c0_9, %c0_10] : memref<16x16xf32, #tpu.memory_space<vmem>>, vector<16x16xf32>
    %cst_11 = arith.constant dense<0.000000e+00> : vector<64x16xf32>
    %12 = tpu.matmul %10, %11, %cst_11 {dimension_numbers = #tpu.dot_dimension_numbers<[1], [0], [0], [1], [0, 0, 1, 1], [], []>} : vector<64x16xf32>, vector<16x16xf32>, vector<64x16xf32> -> vector<64x16xf32>
    %13 = arith.truncf %12 : vector<64x16xf32> to vector<64x16xbf16>
    %cst_12 = arith.constant dense<0.000000e+00> : vector<64x16xf32>
    %14 = tpu.matmul %0, %13, %cst_12 {dimension_numbers = #tpu.dot_dimension_numbers<[1], [0], [0], [1], [0, 0, 1, 1], [], []>} : vector<64x64xbf16>, vector<64x16xbf16>, vector<64x16xf32> -> vector<64x16xf32>
    %c0_13 = arith.constant 0 : index
    %c0_14 = arith.constant 0 : index
    %15 = vector.load %arg6[%c0_13, %c0_14] : memref<1x16xf32, #tpu.memory_space<vmem>>, vector<1x16xf32>
    %16 = vector.broadcast %15 : vector<1x16xf32> to vector<64x16xf32>
    %17 = arith.addf %14, %16 : vector<64x16xf32>
    %cst_15 = arith.constant 0.000000e+00 : f32
    %18 = vector.broadcast %cst_15 : f32 to vector<64x16xf32>
    %19 = arith.maximumf %17, %18 : vector<64x16xf32>
    %c0_16 = arith.constant 0 : index
    %c0_17 = arith.constant 0 : index
    %20 = vector.load %arg7[%c0_16, %c0_17] : memref<16x128xf32, #tpu.memory_space<vmem>>, vector<16x128xf32>
    %c0_18 = arith.constant 0 : index
    %c0_19 = arith.constant 0 : index
    %21 = vector.load %arg8[%c0_18, %c0_19] : memref<32x128xf32, #tpu.memory_space<vmem>>, vector<32x128xf32>
    %c0_20 = arith.constant 0 : index
    %c0_21 = arith.constant 0 : index
    %22 = vector.load %arg9[%c0_20, %c0_21] : memref<1x128xf32, #tpu.memory_space<vmem>>, vector<1x128xf32>
    %c0_22 = arith.constant 0 : index
    %c0_23 = arith.constant 0 : index
    %23 = vector.load %arg10[%c0_22, %c0_23] : memref<16x128xf32, #tpu.memory_space<vmem>>, vector<16x128xf32>
    %c0_24 = arith.constant 0 : index
    %c0_25 = arith.constant 0 : index
    %24 = vector.load %arg11[%c0_24, %c0_25] : memref<32x128xf32, #tpu.memory_space<vmem>>, vector<32x128xf32>
    %c0_26 = arith.constant 0 : index
    %c0_27 = arith.constant 0 : index
    %25 = vector.load %arg12[%c0_26, %c0_27] : memref<1x128xf32, #tpu.memory_space<vmem>>, vector<1x128xf32>
    %cst_28 = arith.constant dense<0.000000e+00> : vector<64x128xf32>
    %26 = tpu.matmul %10, %20, %cst_28 {dimension_numbers = #tpu.dot_dimension_numbers<[1], [0], [0], [1], [0, 0, 1, 1], [], []>} : vector<64x16xf32>, vector<16x128xf32>, vector<64x128xf32> -> vector<64x128xf32>
    %27 = vector.broadcast %22 : vector<1x128xf32> to vector<64x128xf32>
    %28 = arith.addf %26, %27 : vector<64x128xf32>
    %29 = vector.extract_strided_slice %28 {offsets = [0, 0], sizes = [64, 96], strides = [1, 1]} : vector<64x128xf32> to vector<64x96xf32>
    %30 = arith.negf %29 : vector<64x96xf32>
    %31 = math.exp %30 : vector<64x96xf32>
    %cst_29 = arith.constant 1.000000e+00 : f32
    %32 = vector.broadcast %cst_29 : f32 to vector<64x96xf32>
    %33 = arith.addf %32, %31 : vector<64x96xf32>
    %34 = arith.divf %32, %33 : vector<64x96xf32>
    %35 = vector.extract_strided_slice %34 {offsets = [0, 0], sizes = [64, 32], strides = [1, 1]} : vector<64x96xf32> to vector<64x32xf32>
    %36 = vector.extract_strided_slice %34 {offsets = [0, 64], sizes = [64, 32], strides = [1, 1]} : vector<64x96xf32> to vector<64x32xf32>
    %37 = vector.extract_strided_slice %28 {offsets = [0, 96], sizes = [64, 32], strides = [1, 1]} : vector<64x128xf32> to vector<64x32xf32>
    %38 = math.tanh %37 : vector<64x32xf32>
    %39 = arith.mulf %35, %38 : vector<64x32xf32>
    %40 = math.tanh %39 : vector<64x32xf32>
    %41 = arith.mulf %36, %40 : vector<64x32xf32>
    %cst_30 = arith.constant dense<0.000000e+00> : vector<64x128xf32>
    %42 = tpu.matmul %19, %20, %cst_30 {dimension_numbers = #tpu.dot_dimension_numbers<[1], [0], [0], [1], [0, 0, 1, 1], [], []>} : vector<64x16xf32>, vector<16x128xf32>, vector<64x128xf32> -> vector<64x128xf32>
    %cst_31 = arith.constant dense<0.000000e+00> : vector<64x128xf32>
    %43 = tpu.matmul %41, %21, %cst_31 {dimension_numbers = #tpu.dot_dimension_numbers<[1], [0], [0], [1], [0, 0, 1, 1], [], []>} : vector<64x32xf32>, vector<32x128xf32>, vector<64x128xf32> -> vector<64x128xf32>
    %44 = arith.addf %42, %43 : vector<64x128xf32>
    %45 = vector.broadcast %22 : vector<1x128xf32> to vector<64x128xf32>
    %46 = arith.addf %44, %45 : vector<64x128xf32>
    %47 = vector.extract_strided_slice %46 {offsets = [0, 0], sizes = [64, 96], strides = [1, 1]} : vector<64x128xf32> to vector<64x96xf32>
    %48 = arith.negf %47 : vector<64x96xf32>
    %49 = math.exp %48 : vector<64x96xf32>
    %cst_32 = arith.constant 1.000000e+00 : f32
    %50 = vector.broadcast %cst_32 : f32 to vector<64x96xf32>
    %51 = arith.addf %50, %49 : vector<64x96xf32>
    %52 = arith.divf %50, %51 : vector<64x96xf32>
    %53 = vector.extract_strided_slice %52 {offsets = [0, 0], sizes = [64, 32], strides = [1, 1]} : vector<64x96xf32> to vector<64x32xf32>
    %54 = vector.extract_strided_slice %52 {offsets = [0, 32], sizes = [64, 32], strides = [1, 1]} : vector<64x96xf32> to vector<64x32xf32>
    %55 = vector.extract_strided_slice %52 {offsets = [0, 64], sizes = [64, 32], strides = [1, 1]} : vector<64x96xf32> to vector<64x32xf32>
    %56 = vector.extract_strided_slice %46 {offsets = [0, 96], sizes = [64, 32], strides = [1, 1]} : vector<64x128xf32> to vector<64x32xf32>
    %57 = math.tanh %56 : vector<64x32xf32>
    %58 = arith.mulf %54, %39 : vector<64x32xf32>
    %59 = arith.mulf %53, %57 : vector<64x32xf32>
    %60 = arith.addf %58, %59 : vector<64x32xf32>
    %61 = math.tanh %60 : vector<64x32xf32>
    %62 = arith.mulf %55, %61 : vector<64x32xf32>
    %cst_33 = arith.constant dense<0.000000e+00> : vector<64x128xf32>
    %63 = tpu.matmul %19, %23, %cst_33 {dimension_numbers = #tpu.dot_dimension_numbers<[1], [0], [0], [1], [0, 0, 1, 1], [], []>} : vector<64x16xf32>, vector<16x128xf32>, vector<64x128xf32> -> vector<64x128xf32>
    %64 = vector.broadcast %25 : vector<1x128xf32> to vector<64x128xf32>
    %65 = arith.addf %63, %64 : vector<64x128xf32>
    %66 = vector.extract_strided_slice %65 {offsets = [0, 0], sizes = [64, 96], strides = [1, 1]} : vector<64x128xf32> to vector<64x96xf32>
    %67 = arith.negf %66 : vector<64x96xf32>
    %68 = math.exp %67 : vector<64x96xf32>
    %cst_34 = arith.constant 1.000000e+00 : f32
    %69 = vector.broadcast %cst_34 : f32 to vector<64x96xf32>
    %70 = arith.addf %69, %68 : vector<64x96xf32>
    %71 = arith.divf %69, %70 : vector<64x96xf32>
    %72 = vector.extract_strided_slice %71 {offsets = [0, 0], sizes = [64, 32], strides = [1, 1]} : vector<64x96xf32> to vector<64x32xf32>
    %73 = vector.extract_strided_slice %71 {offsets = [0, 64], sizes = [64, 32], strides = [1, 1]} : vector<64x96xf32> to vector<64x32xf32>
    %74 = vector.extract_strided_slice %65 {offsets = [0, 96], sizes = [64, 32], strides = [1, 1]} : vector<64x128xf32> to vector<64x32xf32>
    %75 = math.tanh %74 : vector<64x32xf32>
    %76 = arith.mulf %72, %75 : vector<64x32xf32>
    %77 = math.tanh %76 : vector<64x32xf32>
    %78 = arith.mulf %73, %77 : vector<64x32xf32>
    %cst_35 = arith.constant dense<0.000000e+00> : vector<64x128xf32>
    %79 = tpu.matmul %10, %23, %cst_35 {dimension_numbers = #tpu.dot_dimension_numbers<[1], [0], [0], [1], [0, 0, 1, 1], [], []>} : vector<64x16xf32>, vector<16x128xf32>, vector<64x128xf32> -> vector<64x128xf32>
    %cst_36 = arith.constant dense<0.000000e+00> : vector<64x128xf32>
    %80 = tpu.matmul %78, %24, %cst_36 {dimension_numbers = #tpu.dot_dimension_numbers<[1], [0], [0], [1], [0, 0, 1, 1], [], []>} : vector<64x32xf32>, vector<32x128xf32>, vector<64x128xf32> -> vector<64x128xf32>
    %81 = arith.addf %79, %80 : vector<64x128xf32>
    %82 = vector.broadcast %25 : vector<1x128xf32> to vector<64x128xf32>
    %83 = arith.addf %81, %82 : vector<64x128xf32>
    %84 = vector.extract_strided_slice %83 {offsets = [0, 0], sizes = [64, 96], strides = [1, 1]} : vector<64x128xf32> to vector<64x96xf32>
    %85 = arith.negf %84 : vector<64x96xf32>
    %86 = math.exp %85 : vector<64x96xf32>
    %cst_37 = arith.constant 1.000000e+00 : f32
    %87 = vector.broadcast %cst_37 : f32 to vector<64x96xf32>
    %88 = arith.addf %87, %86 : vector<64x96xf32>
    %89 = arith.divf %87, %88 : vector<64x96xf32>
    %90 = vector.extract_strided_slice %89 {offsets = [0, 0], sizes = [64, 32], strides = [1, 1]} : vector<64x96xf32> to vector<64x32xf32>
    %91 = vector.extract_strided_slice %89 {offsets = [0, 32], sizes = [64, 32], strides = [1, 1]} : vector<64x96xf32> to vector<64x32xf32>
    %92 = vector.extract_strided_slice %89 {offsets = [0, 64], sizes = [64, 32], strides = [1, 1]} : vector<64x96xf32> to vector<64x32xf32>
    %93 = vector.extract_strided_slice %83 {offsets = [0, 96], sizes = [64, 32], strides = [1, 1]} : vector<64x128xf32> to vector<64x32xf32>
    %94 = math.tanh %93 : vector<64x32xf32>
    %95 = arith.mulf %91, %76 : vector<64x32xf32>
    %96 = arith.mulf %90, %94 : vector<64x32xf32>
    %97 = arith.addf %95, %96 : vector<64x32xf32>
    %98 = math.tanh %97 : vector<64x32xf32>
    %99 = arith.mulf %92, %98 : vector<64x32xf32>
    %c0_38 = arith.constant 0 : index
    %c0_39 = arith.constant 0 : index
    %100 = vector.load %arg13[%c0_38, %c0_39] : memref<1x32xf32, #tpu.memory_space<vmem>>, vector<1x32xf32>
    %c0_40 = arith.constant 0 : index
    %c0_41 = arith.constant 0 : index
    %101 = vector.load %arg14[%c0_40, %c0_41] : memref<1x32xf32, #tpu.memory_space<vmem>>, vector<1x32xf32>
    %c0_42 = arith.constant 0 : index
    %c0_43 = arith.constant 0 : index
    %102 = vector.load %arg15[%c0_42, %c0_43] : memref<1x1xf32, #tpu.memory_space<vmem>>, vector<1x1xf32>
    %103 = vector.broadcast %100 : vector<1x32xf32> to vector<64x32xf32>
    %104 = arith.mulf %41, %103 : vector<64x32xf32>
    %105 = vector.broadcast %101 : vector<1x32xf32> to vector<64x32xf32>
    %106 = arith.mulf %99, %105 : vector<64x32xf32>
    %107 = arith.addf %104, %106 : vector<64x32xf32>
    %cst_44 = arith.constant dense<0.000000e+00> : vector<64xf32>
    %108 = vector.multi_reduction <add>, %107, %cst_44 [1] : vector<64x32xf32> to vector<64xf32>
    %109 = vector.shape_cast %108 : vector<64xf32> to vector<64x1xf32>
    %110 = vector.broadcast %102 : vector<1x1xf32> to vector<64x1xf32>
    %111 = arith.addf %109, %110 : vector<64x1xf32>
    %112 = vector.broadcast %100 : vector<1x32xf32> to vector<64x32xf32>
    %113 = arith.mulf %62, %112 : vector<64x32xf32>
    %114 = vector.broadcast %101 : vector<1x32xf32> to vector<64x32xf32>
    %115 = arith.mulf %78, %114 : vector<64x32xf32>
    %116 = arith.addf %113, %115 : vector<64x32xf32>
    %cst_45 = arith.constant dense<0.000000e+00> : vector<64xf32>
    %117 = vector.multi_reduction <add>, %116, %cst_45 [1] : vector<64x32xf32> to vector<64xf32>
    %118 = vector.shape_cast %117 : vector<64xf32> to vector<64x1xf32>
    %119 = vector.broadcast %102 : vector<1x1xf32> to vector<64x1xf32>
    %120 = arith.addf %118, %119 : vector<64x1xf32>
    %121 = arith.maximumf %111, %120 : vector<64x1xf32>
    %122 = arith.subf %111, %121 : vector<64x1xf32>
    %123 = math.exp %122 : vector<64x1xf32>
    %124 = arith.subf %120, %121 : vector<64x1xf32>
    %125 = math.exp %124 : vector<64x1xf32>
    %126 = arith.addf %123, %125 : vector<64x1xf32>
    %127 = tpu.reciprocal %126 {approx = true} : vector<64x1xf32> -> vector<64x1xf32>
    %128 = arith.mulf %123, %127 : vector<64x1xf32>
    %129 = vector.broadcast %128 : vector<64x1xf32> to vector<64x16xf32>
    %130 = arith.mulf %10, %129 : vector<64x16xf32>
    %131 = arith.mulf %125, %127 : vector<64x1xf32>
    %132 = vector.broadcast %131 : vector<64x1xf32> to vector<64x16xf32>
    %133 = arith.mulf %19, %132 : vector<64x16xf32>
    %134 = arith.addf %130, %133 : vector<64x16xf32>
    %135 = arith.truncf %134 : vector<64x16xf32> to vector<64x16xbf16>
    %cst_46 = arith.constant dense<0.000000e+00> : vector<64x16xf32>
    %136 = tpu.matmul %0, %135, %cst_46 {dimension_numbers = #tpu.dot_dimension_numbers<[1], [0], [0], [1], [0, 0, 1, 1], [], []>} : vector<64x64xbf16>, vector<64x16xbf16>, vector<64x16xf32> -> vector<64x16xf32>
    %c0_47 = arith.constant 0 : index
    %c0_48 = arith.constant 0 : index
    %137 = vector.load %arg16[%c0_47, %c0_48] : memref<16x128xf32, #tpu.memory_space<vmem>>, vector<16x128xf32>
    %cst_49 = arith.constant dense<0.000000e+00> : vector<64x128xf32>
    %138 = tpu.matmul %136, %137, %cst_49 {dimension_numbers = #tpu.dot_dimension_numbers<[1], [0], [0], [1], [0, 0, 1, 1], [], []>} : vector<64x16xf32>, vector<16x128xf32>, vector<64x128xf32> -> vector<64x128xf32>
    %c0_50 = arith.constant 0 : index
    %c0_51 = arith.constant 0 : index
    %139 = vector.load %arg17[%c0_50, %c0_51] : memref<1x128xf32, #tpu.memory_space<vmem>>, vector<1x128xf32>
    %140 = vector.broadcast %139 : vector<1x128xf32> to vector<64x128xf32>
    %141 = arith.addf %138, %140 : vector<64x128xf32>
    %142 = tpu.iota {dimensions = array<i32: 1>} : vector<64x128xi32>
    %c4_i32 = arith.constant 4 : i32
    %143 = vector.broadcast %c4_i32 : i32 to vector<64x128xi32>
    %144 = arith.cmpi slt, %142, %143 : vector<64x128xi32>
    %cst_52 = arith.constant -1.000000e+30 : f32
    %145 = vector.broadcast %cst_52 : f32 to vector<64x128xf32>
    %146 = arith.select %144, %141, %145 : vector<64x128xi1>, vector<64x128xf32>
    %cst_53 = arith.constant dense<0xFF800000> : vector<64xf32>
    %147 = vector.multi_reduction <maximumf>, %146, %cst_53 [1] : vector<64x128xf32> to vector<64xf32>
    %148 = vector.shape_cast %147 : vector<64xf32> to vector<64x1xf32>
    %149 = vector.broadcast %148 : vector<64x1xf32> to vector<64x128xf32>
    %150 = arith.subf %141, %149 : vector<64x128xf32>
    %151 = math.exp %150 : vector<64x128xf32>
    %cst_54 = arith.constant 0.000000e+00 : f32
    %152 = vector.broadcast %cst_54 : f32 to vector<64x128xf32>
    %153 = arith.select %144, %151, %152 : vector<64x128xi1>, vector<64x128xf32>
    %cst_55 = arith.constant dense<0.000000e+00> : vector<64xf32>
    %154 = vector.multi_reduction <add>, %153, %cst_55 [1] : vector<64x128xf32> to vector<64xf32>
    %155 = vector.shape_cast %154 : vector<64xf32> to vector<64x1xf32>
    %156 = math.log %155 : vector<64x1xf32>
    %157 = vector.broadcast %156 : vector<64x1xf32> to vector<64x128xf32>
    %158 = arith.subf %150, %157 : vector<64x128xf32>
    %c0_56 = arith.constant 0 : index
    %c0_57 = arith.constant 0 : index
    %159 = vector.load %arg18[%c0_56, %c0_57] : memref<64x128xf32, #tpu.memory_space<vmem>>, vector<64x128xf32>
    tpu.vector_store %arg18[%c0_56, %c0_57], %158 {strides = array<i32>} : memref<64x128xf32, #tpu.memory_space<vmem>>, vector<64x128xf32>,
    return
  }
  func.func @transform_0(%arg0: i32) -> (i32, i32) {
    %c0_i32 = arith.constant 0 : i32
    %c0_i32_0 = arith.constant 0 : i32
    %c0_i32_1 = arith.constant 0 : i32
    return %c0_i32, %c0_i32_0 : i32, i32
  }
  func.func @transform_1(%arg0: i32) -> (i32, i32) {
    %c0_i32 = arith.constant 0 : i32
    %c0_i32_0 = arith.constant 0 : i32
    %c0_i32_1 = arith.constant 0 : i32
    return %c0_i32, %c0_i32_0 : i32, i32
  }
  func.func @transform_2(%arg0: i32) -> (i32, i32) {
    %c0_i32 = arith.constant 0 : i32
    %c0_i32_0 = arith.constant 0 : i32
    %c0_i32_1 = arith.constant 0 : i32
    return %c0_i32, %c0_i32_0 : i32, i32
  }
  func.func @transform_3(%arg0: i32) -> (i32, i32) {
    %c0_i32 = arith.constant 0 : i32
    %c0_i32_0 = arith.constant 0 : i32
    %c0_i32_1 = arith.constant 0 : i32
    return %c0_i32, %c0_i32_0 : i32, i32
  }
  func.func @transform_4(%arg0: i32) -> (i32, i32) {
    %c0_i32 = arith.constant 0 : i32
    %c0_i32_0 = arith.constant 0 : i32
    %c0_i32_1 = arith.constant 0 : i32
    return %c0_i32, %c0_i32_0 : i32, i32
  }
  func.func @transform_5(%arg0: i32) -> (i32, i32) {
    %c0_i32 = arith.constant 0 : i32
    %c0_i32_0 = arith.constant 0 : i32
    %c0_i32_1 = arith.constant 0 : i32
    return %c0_i32, %c0_i32_0 : i32, i32
  }
  func.func @transform_6(%arg0: i32) -> (i32, i32) {
    %c0_i32 = arith.constant 0 : i32
    %c0_i32_0 = arith.constant 0 : i32
    %c0_i32_1 = arith.constant 0 : i32
    return %c0_i32, %c0_i32_0 : i32, i32
  }
  func.func @transform_7(%arg0: i32) -> (i32, i32) {
    %c0_i32 = arith.constant 0 : i32
    %c0_i32_0 = arith.constant 0 : i32
    %c0_i32_1 = arith.constant 0 : i32
    return %c0_i32, %c0_i32_0 : i32, i32
  }
  func.func @transform_8(%arg0: i32) -> (i32, i32) {
    %c0_i32 = arith.constant 0 : i32
    %c0_i32_0 = arith.constant 0 : i32
    %c0_i32_1 = arith.constant 0 : i32
    return %c0_i32, %c0_i32_0 : i32, i32
  }
  func.func @transform_9(%arg0: i32) -> (i32, i32) {
    %c0_i32 = arith.constant 0 : i32
    %c0_i32_0 = arith.constant 0 : i32
    %c0_i32_1 = arith.constant 0 : i32
    return %c0_i32, %c0_i32_0 : i32, i32
  }
  func.func @transform_10(%arg0: i32) -> (i32, i32) {
    %c0_i32 = arith.constant 0 : i32
    %c0_i32_0 = arith.constant 0 : i32
    %c0_i32_1 = arith.constant 0 : i32
    return %c0_i32, %c0_i32_0 : i32, i32
  }
  func.func @transform_11(%arg0: i32) -> (i32, i32) {
    %c0_i32 = arith.constant 0 : i32
    %c0_i32_0 = arith.constant 0 : i32
    %c0_i32_1 = arith.constant 0 : i32
    return %c0_i32, %c0_i32_0 : i32, i32
  }
  func.func @transform_12(%arg0: i32) -> (i32, i32) {
    %c0_i32 = arith.constant 0 : i32
    %c0_i32_0 = arith.constant 0 : i32
    %c0_i32_1 = arith.constant 0 : i32
    return %c0_i32, %c0_i32_0 : i32, i32
  }
  func.func @transform_13(%arg0: i32) -> (i32, i32) {
    %c0_i32 = arith.constant 0 : i32
    %c0_i32_0 = arith.constant 0 : i32
    %c0_i32_1 = arith.constant 0 : i32
    return %c0_i32, %c0_i32_0 : i32, i32
  }
  func.func @transform_14(%arg0: i32) -> (i32, i32) {
    %c0_i32 = arith.constant 0 : i32
    %c0_i32_0 = arith.constant 0 : i32
    %c0_i32_1 = arith.constant 0 : i32
    return %c0_i32, %c0_i32_0 : i32, i32
  }
  func.func @transform_15(%arg0: i32) -> (i32, i32) {
    %c0_i32 = arith.constant 0 : i32
    %c0_i32_0 = arith.constant 0 : i32
    %c0_i32_1 = arith.constant 0 : i32
    return %c0_i32, %c0_i32_0 : i32, i32
  }
  func.func @transform_16(%arg0: i32) -> (i32, i32) {
    %c0_i32 = arith.constant 0 : i32
    %c0_i32_0 = arith.constant 0 : i32
    %c0_i32_1 = arith.constant 0 : i32
    return %c0_i32, %c0_i32_0 : i32, i32
  }
  func.func @transform_17(%arg0: i32) -> (i32, i32) {
    %c0_i32 = arith.constant 0 : i32
    %c0_i32_0 = arith.constant 0 : i32
    %c0_i32_1 = arith.constant 0 : i32
    return %c0_i32, %c0_i32_0 : i32, i32
  }
}

</mosaic_0001>

<llo_original>
// kernel: tpu_custom_call.1
$region0: #{tpu_custom_call.1}
  #allocation0 [shape = 'u32[]', space=smem, size = 0x4, offset = 0x4, fixed_abs, tag = 'smem constant byte address 0x4 - core index']
  #allocation1 [shape = 'u32[144,128]{1,0:T(1,128)}', space=vmem, size = 0x12000, scoped, tag = 'internal scratch']
  #allocation2 [shape = 'f32[1,1]{1,0:T(1,128)S(1)}', space=vmem, size = 0x200, scoped, tag = 'scoped memory for tpu_custom_call.1']
  %s0 = inlined_call_operand.vmem [shape: bf16[64,64], index: 0, kind: input, shape index: {}]
  %s1 = inlined_call_operand.vmem [shape: f32[64,8], index: 1, kind: input, shape index: {}]
  %s2 = inlined_call_operand.hbm [shape: f32[8,16], index: 2, kind: input, shape index: {}]
  %s3 = inlined_call_operand.vmem [shape: f32[1,16], index: 3, kind: input, shape index: {}]
  %s4 = inlined_call_operand.hbm [shape: f32[16,16], index: 4, kind: input, shape index: {}]
  %s5 = inlined_call_operand.hbm [shape: f32[1,16], index: 5, kind: input, shape index: {}]
  %s6 = inlined_call_operand.hbm [shape: f32[16,128], index: 6, kind: input, shape index: {}]
  %s7 = inlined_call_operand.vmem [shape: f32[32,128], index: 7, kind: input, shape index: {}]
  %s8 = inlined_call_operand.hbm [shape: f32[1,128], index: 8, kind: input, shape index: {}]
  %s9 = inlined_call_operand.hbm [shape: f32[16,128], index: 9, kind: input, shape index: {}]
  %s10 = inlined_call_operand.vmem [shape: f32[32,128], index: 10, kind: input, shape index: {}]
  %s11 = inlined_call_operand.vmem [shape: f32[1,128], index: 11, kind: input, shape index: {}]
  %s12 = inlined_call_operand.vmem [shape: f32[1,32], index: 12, kind: input, shape index: {}]
  %s13 = inlined_call_operand.vmem [shape: f32[1,32], index: 13, kind: input, shape index: {}]
  %s14 = inlined_call_operand.<no memory space> [shape: f32[1,1], index: 14, kind: input, shape index: {}]
  %s15 = inlined_call_operand.vmem [shape: f32[16,128], index: 15, kind: input, shape index: {}]
  %s16 = inlined_call_operand.vmem [shape: f32[1,128], index: 16, kind: input, shape index: {}]
  %s17 = inlined_call_operand.hbm [shape: f32[64,128], index: 17, kind: output, shape index: {}]
  %s18 = sld [smem:[#allocation0]]
  $region102: #{tpu_custom_call.1} parent=0
    _
  %s20 = ssub.s32 1, %s18
  %s21 = scalar_select 0, %s20, %s18
  %v22 = vstv %s14
  %23 = vst [vmem:[#allocation2] sm:$0x1] %v22
  $region1: #{tpu_custom_call.1} parent=0
    #allocation3 [shape = 'u8[4096]{0}', space=vmem, size = 0x1000, scoped, tag = 'input window, operand 2, single buffered']
    #allocation4 [shape = 's32[1]{0}', space=sflag, size = 0x4, scoped, tag = 'scoped memory for tpu_custom_call.1']
    #allocation5 [shape = 's32[1]{0}', space=sflag, size = 0x4, scoped, tag = 'scoped memory for tpu_custom_call.1']
    #allocation6 [shape = 'u8[8192]{0}', space=vmem, size = 0x2000, scoped, tag = 'input window, operand 4, single buffered']
    #allocation7 [shape = 's32[1]{0}', space=sflag, size = 0x4, scoped, tag = 'scoped memory for tpu_custom_call.1']
    #allocation8 [shape = 'u8[512]{0}', space=vmem, size = 0x400, scoped, tag = 'input window, operand 5, single buffered']
    #allocation9 [shape = 'u8[8192]{0}', space=vmem, size = 0x2000, scoped, tag = 'input window, operand 6, single buffered']
    #allocation10 [shape = 's32[1]{0}', space=sflag, size = 0x4, scoped, tag = 'scoped memory for tpu_custom_call.1']
    #allocation11 [shape = 'u8[512]{0}', space=vmem, size = 0x400, scoped, tag = 'input window, operand 8, single buffered']
    #allocation12 [shape = 'u8[8192]{0}', space=vmem, size = 0x2000, scoped, tag = 'input window, operand 9, single buffered']
    #allocation13 [shape = 's32[1]{0}', space=sflag, size = 0x4, scoped, tag = 'scoped memory for tpu_custom_call.1']
    #allocation14 [shape = 'u8[32768]{0}', space=vmem, size = 0x8000, scoped, tag = 'output window, operand 0, single buffered']
    %24 = vsyncpa [#allocation4], 0
    %25 = vsyncpa [#allocation7], 0
    %26 = vsyncpa [#allocation10], 0
    %27 = vsyncpa [#allocation13], 0
    %28 = vsyncpa [#allocation5], 0
    // Predicated region
    $region2: #{tpu_custom_call.1} parent=1 // pred_check
      _
    $region3: #{tpu_custom_call.1} parent=1 // pred_check_branch
      %30 = sbr.rel (0) target = $region5
    $region4: #{tpu_custom_call.1} parent=1 // pred_region
      _
    $region5: #{tpu_custom_call.1} parent=1 // pred_fallthru
      _
    // Predicated region
    $region6: #{tpu_custom_call.1} parent=1 // pred_check
      _
    $region7: #{tpu_custom_call.1} parent=1 // pred_check_branch
      %32 = sbr.rel (0) target = $region9
    $region8: #{tpu_custom_call.1} parent=1 // pred_region
      _
    $region9: #{tpu_custom_call.1} parent=1 // pred_fallthru
      _
    // Predicated region
    $region10: #{tpu_custom_call.1} parent=1 // pred_check
      _
    $region11: #{tpu_custom_call.1} parent=1 // pred_check_branch
      %34 = sbr.rel (0) target = $region13
    $region12: #{tpu_custom_call.1} parent=1 // pred_region
      %s36 = ssub.s32 128, 128
      %37 = vsyncadd [#allocation4], %s36
      %s39 = sshll.u32 [#allocation3], 4
      %s40 = int_to_ptr.vmem [resolvable:$true] %s39
      %42 = dma.hbm_to_vmem [thread:$0]  %s2, 128, %s40, [#allocation4]
    $region13: #{tpu_custom_call.1} parent=1 // pred_fallthru
      _
    // Predicated region
    $region14: #{tpu_custom_call.1} parent=1 // pred_check
      _
    $region15: #{tpu_custom_call.1} parent=1 // pred_check_branch
      %44 = sbr.rel (0) target = $region17
    $region16: #{tpu_custom_call.1} parent=1 // pred_region
      _
    $region17: #{tpu_custom_call.1} parent=1 // pred_fallthru
      _
    // Predicated region
    $region18: #{tpu_custom_call.1} parent=1 // pred_check
      _
    $region19: #{tpu_custom_call.1} parent=1 // pred_check_branch
      %46 = sbr.rel (0) target = $region21
    $region20: #{tpu_custom_call.1} parent=1 // pred_region
      %s48 = ssub.s32 256, 256
      %49 = vsyncadd [#allocation7], %s48
      %s50 = sshll.u32 [#allocation6], 4
      %s51 = int_to_ptr.vmem [resolvable:$true] %s50
      %56 = dma.hbm_to_vmem [thread:$0]  %s4, 256, %s51, [#allocation7], 128, 128, 8
    $region21: #{tpu_custom_call.1} parent=1 // pred_fallthru
      _
    // Predicated region
    $region22: #{tpu_custom_call.1} parent=1 // pred_check
      _
    $region23: #{tpu_custom_call.1} parent=1 // pred_check_branch
      %58 = sbr.rel (0) target = $region25
    $region24: #{tpu_custom_call.1} parent=1 // pred_region
      %s60 = ssub.s32 16, 16
      %61 = vsyncadd [#allocation7], %s60
      %s63 = sshll.u32 [#allocation8], 4
      %s64 = int_to_ptr.vmem [resolvable:$true] %s63
      %66 = dma.hbm_to_vmem [thread:$0]  %s5, 16, %s64, [#allocation7]
    $region25: #{tpu_custom_call.1} parent=1 // pred_fallthru
      _
    // Predicated region
    $region26: #{tpu_custom_call.1} parent=1 // pred_check
      _
    $region27: #{tpu_custom_call.1} parent=1 // pred_check_branch
      %68 = sbr.rel (0) target = $region29
    $region28: #{tpu_custom_call.1} parent=1 // pred_region
      %s70 = ssub.s32 256, 256
      %71 = vsyncadd [#allocation10], %s70
      %s72 = sshll.u32 [#allocation9], 4
      %s73 = int_to_ptr.vmem [resolvable:$true] %s72
      %78 = dma.hbm_to_vmem [thread:$0]  %s6, 256, %s73, [#allocation10], 128, 128, 8
    $region29: #{tpu_custom_call.1} parent=1 // pred_fallthru
      _
    // Predicated region
    $region30: #{tpu_custom_call.1} parent=1 // pred_check
      _
    $region31: #{tpu_custom_call.1} parent=1 // pred_check_branch
      %80 = sbr.rel (0) target = $region33
    $region32: #{tpu_custom_call.1} parent=1 // pred_region
      _
    $region33: #{tpu_custom_call.1} parent=1 // pred_fallthru
      _
    // Predicated region
    $region34: #{tpu_custom_call.1} parent=1 // pred_check
      _
    $region35: #{tpu_custom_call.1} parent=1 // pred_check_branch
      %82 = sbr.rel (0) target = $region37
    $region36: #{tpu_custom_call.1} parent=1 // pred_region
      %s84 = ssub.s32 16, 16
      %85 = vsyncadd [#allocation10], %s84
      %s87 = sshll.u32 [#allocation11], 4
      %s88 = int_to_ptr.vmem [resolvable:$true] %s87
      %90 = dma.hbm_to_vmem [thread:$0]  %s8, 16, %s88, [#allocation10]
    $region37: #{tpu_custom_call.1} parent=1 // pred_fallthru
      _
    // Predicated region
    $region38: #{tpu_custom_call.1} parent=1 // pred_check
      _
    $region39: #{tpu_custom_call.1} parent=1 // pred_check_branch
      %92 = sbr.rel (0) target = $region41
    $region40: #{tpu_custom_call.1} parent=1 // pred_region
      %s94 = ssub.s32 256, 256
      %95 = vsyncadd [#allocation13], %s94
      %s96 = sshll.u32 [#allocation12], 4
      %s97 = int_to_ptr.vmem [resolvable:$true] %s96
      %102 = dma.hbm_to_vmem [thread:$0]  %s9, 256, %s97, [#allocation13], 128, 128, 8
    $region41: #{tpu_custom_call.1} parent=1 // pred_fallthru
      _
    // Predicated region
    $region42: #{tpu_custom_call.1} parent=1 // pred_check
      _
    $region43: #{tpu_custom_call.1} parent=1 // pred_check_branch
      %104 = sbr.rel (0) target = $region45
    $region44: #{tpu_custom_call.1} parent=1 // pred_region
      _
    $region45: #{tpu_custom_call.1} parent=1 // pred_fallthru
      _
    // Predicated region
    $region46: #{tpu_custom_call.1} parent=1 // pred_check
      _
    $region47: #{tpu_custom_call.1} parent=1 // pred_check_branch
      %106 = sbr.rel (0) target = $region49
    $region48: #{tpu_custom_call.1} parent=1 // pred_region
      _
    $region49: #{tpu_custom_call.1} parent=1 // pred_fallthru
      _
    // Predicated region
    $region50: #{tpu_custom_call.1} parent=1 // pred_check
      _
    $region51: #{tpu_custom_call.1} parent=1 // pred_check_branch
      %108 = sbr.rel (0) target = $region53
    $region52: #{tpu_custom_call.1} parent=1 // pred_region
      _
    $region53: #{tpu_custom_call.1} parent=1 // pred_fallthru
      _
    // Predicated region
    $region54: #{tpu_custom_call.1} parent=1 // pred_check
      _
    $region55: #{tpu_custom_call.1} parent=1 // pred_check_branch
      %110 = sbr.rel (0) target = $region57
    $region56: #{tpu_custom_call.1} parent=1 // pred_region
      _
    $region57: #{tpu_custom_call.1} parent=1 // pred_fallthru
      _
    // Predicated region
    $region58: #{tpu_custom_call.1} parent=1 // pred_check
      _
    $region59: #{tpu_custom_call.1} parent=1 // pred_check_branch
      %112 = sbr.rel (0) target = $region61
    $region60: #{tpu_custom_call.1} parent=1 // pred_region
      _
    $region61: #{tpu_custom_call.1} parent=1 // pred_fallthru
      _
    // Predicated region
    $region62: #{tpu_custom_call.1} parent=1 // pred_check
      _
    $region63: #{tpu_custom_call.1} parent=1 // pred_check_branch
      %114 = sbr.rel (0) target = $region65
    $region64: #{tpu_custom_call.1} parent=1 // pred_region
      _
    $region65: #{tpu_custom_call.1} parent=1 // pred_fallthru
      _
    // Predicated region
    $region66: #{tpu_custom_call.1} parent=1 // pred_check
      _
    $region67: #{tpu_custom_call.1} parent=1 // pred_check_branch
      %116 = sbr.rel (0) target = $region69
    $region68: #{tpu_custom_call.1} parent=1 // pred_region
      _
    $region69: #{tpu_custom_call.1} parent=1 // pred_fallthru
      _
    // Predicated region
    $region70: #{tpu_custom_call.1} parent=1 // pred_check
      _
    $region71: #{tpu_custom_call.1} parent=1 // pred_check_branch
      %118 = sbr.rel (0) target = $region73
    $region72: #{tpu_custom_call.1} parent=1 // pred_region
      %119 = dma.done [#allocation4], 128
    $region73: #{tpu_custom_call.1} parent=1 // pred_fallthru
      _
    // Predicated region
    $region74: #{tpu_custom_call.1} parent=1 // pred_check
      _
    $region75: #{tpu_custom_call.1} parent=1 // pred_check_branch
      %121 = sbr.rel (0) target = $region77
    $region76: #{tpu_custom_call.1} parent=1 // pred_region
      %122 = dma.done [#allocation7], 256
    $region77: #{tpu_custom_call.1} parent=1 // pred_fallthru
      _
    // Predicated region
    $region78: #{tpu_custom_call.1} parent=1 // pred_check
      _
    $region79: #{tpu_custom_call.1} parent=1 // pred_check_branch
      %124 = sbr.rel (0) target = $region81
    $region80: #{tpu_custom_call.1} parent=1 // pred_region
      %125 = dma.done [#allocation7], 16
    $region81: #{tpu_custom_call.1} parent=1 // pred_fallthru
      _
    // Predicated region
    $region82: #{tpu_custom_call.1} parent=1 // pred_check
      _
    $region83: #{tpu_custom_call.1} parent=1 // pred_check_branch
      %127 = sbr.rel (0) target = $region85
    $region84: #{tpu_custom_call.1} parent=1 // pred_region
      %128 = dma.done [#allocation10], 256
    $region85: #{tpu_custom_call.1} parent=1 // pred_fallthru
      _
    // Predicated region
    $region86: #{tpu_custom_call.1} parent=1 // pred_check
      _
    $region87: #{tpu_custom_call.1} parent=1 // pred_check_branch
      %130 = sbr.rel (0) target = $region89
    $region88: #{tpu_custom_call.1} parent=1 // pred_region
      %131 = dma.done [#allocation10], 16
    $region89: #{tpu_custom_call.1} parent=1 // pred_fallthru
      _
    // Predicated region
    $region90: #{tpu_custom_call.1} parent=1 // pred_check
      _
    $region91: #{tpu_custom_call.1} parent=1 // pred_check_branch
      %133 = sbr.rel (0) target = $region93
    $region92: #{tpu_custom_call.1} parent=1 // pred_region
      %134 = dma.done [#allocation13], 256
    $region93: #{tpu_custom_call.1} parent=1 // pred_fallthru
      _
    %v136 = vld [vmem:[%s0] sm:$0xf]
    %v137 = vld [vmem:[%s0 + $0x4] sm:$0xf]
    %v138 = vld [vmem:[%s0 + $0x8] sm:$0xf]
    %v139 = vld [vmem:[%s0 + $0xc] sm:$0xf]
    %v140 = vld [vmem:[%s0 + $0x10] sm:$0xf]
    %v141 = vld [vmem:[%s0 + $0x14] sm:$0xf]
    %v142 = vld [vmem:[%s0 + $0x18] sm:$0xf]
    %v143 = vld [vmem:[%s0 + $0x1c] sm:$0xf]
    %v144 = vld [vmem:[%s1] sm:$0xff]
    %v145 = vld [vmem:[%s1 + $0x8] sm:$0xff]
    %v146 = vld [vmem:[%s1 + $0x10] sm:$0xff]
    %v147 = vld [vmem:[%s1 + $0x18] sm:$0xff]
    %v148 = vld [vmem:[%s1 + $0x20] sm:$0xff]
    %v149 = vld [vmem:[%s1 + $0x28] sm:$0xff]
    %v150 = vld [vmem:[%s1 + $0x30] sm:$0xff]
    %v151 = vld [vmem:[%s1 + $0x38] sm:$0xff]
    %v152 = vpack.c.bf16 %v145, %v144
    %v153 = vpack.c.bf16 %v147, %v146
    %v154 = vpack.c.bf16 %v149, %v148
    %v155 = vpack.c.bf16 %v151, %v150
    %v164 = vunpack.c.l.b16 %v136
    %v165 = vunpack.c.l.b16 %v137
    %v166 = vunpack.c.l.b16 %v138
    %v167 = vunpack.c.l.b16 %v139
    %v168 = vunpack.c.l.b16 %v140
    %v169 = vunpack.c.l.b16 %v141
    %v170 = vunpack.c.l.b16 %v142
    %v171 = vunpack.c.l.b16 %v143
    %v172 = vpack.c.b16 %v165, %v164
    %v173 = vpack.c.b16 %v167, %v166
    %v174 = vpack.c.b16 %v169, %v168
    %v175 = vpack.c.b16 %v171, %v170
    %vm176 = vcmask 523264
    %v178 = vsel %vm176, %v172, 0
    %v181 = vsel %vm176, %v173, 0
    %v184 = vsel %vm176, %v174, 0
    %v187 = vsel %vm176, %v175, 0
    %189 = vmatprep.subr.bf16.mxu0 0
    %190 = vmatpush1.bf16.msra.mxu0 %v152
    %191 = vmatprep.subr.bf16.mxu0 0
    %192 = vmatpush1.bf16.msra.mxu0 %v153
    %193 = vmatprep.subr.bf16.mxu0 0
    %194 = vmatpush1.bf16.msra.mxu0 %v154
    %195 = vmatprep.subr.bf16.mxu0 0
    %196 = vmatpush1.bf16.msra.mxu0 %v155
    %197 = vmatprep.subr.bf16.mxu0 0
    %198 = vmatpush1.bf16.msra.mxu0 0
    %199 = vmatprep.subr.bf16.mxu0 0
    %200 = vmatpush1.bf16.msra.mxu0 0
    %201 = vmatprep.subr.bf16.mxu0 0
    %202 = vmatpush1.bf16.msra.mxu0 0
    %203 = vmatprep.subr.bf16.mxu0 0
    %204 = vmatpush1.bf16.msra.mxu0 0
    %205 = vmatprep.subr.bf16.mxu0 0
    %206 = vmatpush1.bf16.msra.mxu0 0
    %207 = vmatprep.subr.bf16.mxu0 0
    %208 = vmatpush1.bf16.msra.mxu0 0
    %209 = vmatprep.subr.bf16.mxu0 0
    %210 = vmatpush1.bf16.msra.mxu0 0
    %211 = vmatprep.subr.bf16.mxu0 0
    %212 = vmatpush1.bf16.msra.mxu0 0
    %213 = vmatprep.subr.bf16.mxu0 0
    %214 = vmatpush1.bf16.msra.mxu0 0
    %215 = vmatprep.subr.bf16.mxu0 0
    %216 = vmatpush1.bf16.msra.mxu0 0
    %217 = vmatprep.subr.bf16.mxu0 0
    %218 = vmatpush1.bf16.msra.mxu0 0
    %219 = vmatprep.subr.bf16.mxu0 0
    %220 = vmatpush1.bf16.msra.mxu0 0
    %221 = vmatprep.mubr.bf16.mxu0 0
    %222 = vmatmul.mubr.bf16.gmra.mrb[0].mxu0 %v178
    %v223 = vpop.f32.mrb[0].mxu0
    %v224 = vadd.f32 0.0, %v223
    %v225 = vpop.f32.mrb[0].mxu0
    %v226 = vpop.f32.mrb[0].mxu0
    %v227 = vadd.f32 0.0, %v226
    %v228 = vpop.f32.mrb[0].mxu0
    %229 = vmatprep.mubr.bf16.mxu0 0
    %230 = vmatmul.mubr.bf16.gmra.mrb[0].mxu0 %v181
    %v231 = vpop.f32.mrb[0].mxu0
    %v232 = vadd.f32 0.0, %v231
    %v233 = vpop.f32.mrb[0].mxu0
    %v234 = vpop.f32.mrb[0].mxu0
    %v235 = vadd.f32 0.0, %v234
    %v236 = vpop.f32.mrb[0].mxu0
    %237 = vmatprep.mubr.bf16.mxu0 0
    %238 = vmatmul.mubr.bf16.gmra.mrb[0].mxu0 %v184
    %v239 = vpop.f32.mrb[0].mxu0
    %v240 = vadd.f32 0.0, %v239
    %v241 = vpop.f32.mrb[0].mxu0
    %v242 = vpop.f32.mrb[0].mxu0
    %v243 = vadd.f32 0.0, %v242
    %v244 = vpop.f32.mrb[0].mxu0
    %245 = vmatprep.mubr.bf16.mxu0 0
    %246 = vmatmul.mubr.bf16.gmra.mrb[0].mxu0 %v187
    %v247 = vpop.f32.mrb[0].mxu0
    %v248 = vadd.f32 0.0, %v247
    %v249 = vpop.f32.mrb[0].mxu0
    %v250 = vpop.f32.mrb[0].mxu0
    %v251 = vadd.f32 0.0, %v250
    %v252 = vpop.f32.mrb[0].mxu0
    %253 = vdwg.mxu0
    %v254 = vld [vmem:[#allocation3] sm:$0xff]
    %v255 = vld [vmem:[%s3] sm:$0x1]
    %v257 = vlaneseq
    %v258 = vshrl.u32 %v257, 7
    %v259 = vsub.s32 0, %v258
    %v260 = vrot.slane %v255, %v259
    %vm262 = vcmask 64512
    %v264 = vsel %vm262, %v224, 0
    %v267 = vsel %vm262, %v227, 0
    %v270 = vsel %vm262, %v232, 0
    %v273 = vsel %vm262, %v235, 0
    %v276 = vsel %vm262, %v240, 0
    %v279 = vsel %vm262, %v243, 0
    %v282 = vsel %vm262, %v248, 0
    %v285 = vsel %vm262, %v251, 0
    %287 = vmatprep.subr.mxu0 0.0
    %288 = vmatpush1.msra.mxu0 %v254
    %289 = vmatprep.subr.mxu0 0.0
    %290 = vmatpush1.msra.mxu0 0.0
    %291 = vmatprep.subr.mxu0 0.0
    %292 = vmatpush1.msra.mxu0 0.0
    %293 = vmatprep.subr.mxu0 0.0
    %294 = vmatpush1.msra.mxu0 0.0
    %295 = vmatprep.subr.mxu0 0.0
    %296 = vmatpush1.msra.mxu0 0.0
    %297 = vmatprep.subr.mxu0 0.0
    %298 = vmatpush1.msra.mxu0 0.0
    %299 = vmatprep.subr.mxu0 0.0
    %300 = vmatpush1.msra.mxu0 0.0
    %301 = vmatprep.subr.mxu0 0.0
    %302 = vmatpush1.msra.mxu0 0.0
    %303 = vmatprep.subr.mxu0 0.0
    %304 = vmatpush1.msra.mxu0 0.0
    %305 = vmatprep.subr.mxu0 0.0
    %306 = vmatpush1.msra.mxu0 0.0
    %307 = vmatprep.subr.mxu0 0.0
    %308 = vmatpush1.msra.mxu0 0.0
    %309 = vmatprep.subr.mxu0 0.0
    %310 = vmatpush1.msra.mxu0 0.0
    %311 = vmatprep.subr.mxu0 0.0
    %312 = vmatpush1.msra.mxu0 0.0
    %313 = vmatprep.subr.mxu0 0.0
    %314 = vmatpush1.msra.mxu0 0.0
    %315 = vmatprep.subr.mxu0 0.0
    %316 = vmatpush1.msra.mxu0 0.0
    %317 = vmatprep.subr.mxu0 0.0
    %318 = vmatpush1.msra.mxu0 0.0
    %319 = vmatprep.subr.mxu0 0.0
    %320 = vmatpush1.msra.mxu0 0.0
    %321 = vmatprep.subr.mxu0 0.0
    %322 = vmatpush1.msra.mxu0 0.0
    %323 = vmatprep.subr.mxu0 0.0
    %324 = vmatpush1.msra.mxu0 0.0
    %325 = vmatprep.subr.mxu0 0.0
    %326 = vmatpush1.msra.mxu0 0.0
    %327 = vmatprep.subr.mxu0 0.0
    %328 = vmatpush1.msra.mxu0 0.0
    %329 = vmatprep.subr.mxu0 0.0
    %330 = vmatpush1.msra.mxu0 0.0
    %331 = vmatprep.subr.mxu0 0.0
    %332 = vmatpush1.msra.mxu0 0.0
    %333 = vmatprep.subr.mxu0 0.0
    %334 = vmatpush1.msra.mxu0 0.0
    %335 = vmatprep.subr.mxu0 0.0
    %336 = vmatpush1.msra.mxu0 0.0
    %337 = vmatprep.subr.mxu0 0.0
    %338 = vmatpush1.msra.mxu0 0.0
    %339 = vmatprep.subr.mxu0 0.0
    %340 = vmatpush1.msra.mxu0 0.0
    %341 = vmatprep.subr.mxu0 0.0
    %342 = vmatpush1.msra.mxu0 0.0
    %343 = vmatprep.subr.mxu0 0.0
    %344 = vmatpush1.msra.mxu0 0.0
    %345 = vmatprep.subr.mxu0 0.0
    %346 = vmatpush1.msra.mxu0 0.0
    %347 = vmatprep.subr.mxu0 0.0
    %348 = vmatpush1.msra.mxu0 0.0
    %349 = vmatprep.subr.mxu0 0.0
    %350 = vmatpush1.msra.mxu0 0.0
    %351 = vmatprep.mubr.f32.mxu0 0.0
    %352 = vmatmul.mubr.f32.gmra.mrb[0].mxu0 %v264
    %v353 = vpop.f32.mrb[0].mxu0
    %v354 = vadd.f32 %v260, %v353
    %v355 = vpop.f32.mrb[0].mxu0
    %356 = vmatprep.mubr.f32.mxu0 0.0
    %357 = vmatmul.mubr.f32.gmra.mrb[0].mxu0 %v267
    %v358 = vpop.f32.mrb[0].mxu0
    %v359 = vadd.f32 %v260, %v358
    %v360 = vpop.f32.mrb[0].mxu0
    %361 = vmatprep.mubr.f32.mxu0 0.0
    %362 = vmatmul.mubr.f32.gmra.mrb[0].mxu0 %v270
    %v363 = vpop.f32.mrb[0].mxu0
    %v364 = vadd.f32 %v260, %v363
    %v365 = vpop.f32.mrb[0].mxu0
    %366 = vmatprep.mubr.f32.mxu0 0.0
    %367 = vmatmul.mubr.f32.gmra.mrb[0].mxu0 %v273
    %v368 = vpop.f32.mrb[0].mxu0
    %v369 = vadd.f32 %v260, %v368
    %v370 = vpop.f32.mrb[0].mxu0
    %371 = vmatprep.mubr.f32.mxu0 0.0
    %372 = vmatmul.mubr.f32.gmra.mrb[0].mxu0 %v276
    %v373 = vpop.f32.mrb[0].mxu0
    %v374 = vadd.f32 %v260, %v373
    %v375 = vpop.f32.mrb[0].mxu0
    %376 = vmatprep.mubr.f32.mxu0 0.0
    %377 = vmatmul.mubr.f32.gmra.mrb[0].mxu0 %v279
    %v378 = vpop.f32.mrb[0].mxu0
    %v379 = vadd.f32 %v260, %v378
    %v380 = vpop.f32.mrb[0].mxu0
    %381 = vmatprep.mubr.f32.mxu0 0.0
    %382 = vmatmul.mubr.f32.gmra.mrb[0].mxu0 %v282
    %v383 = vpop.f32.mrb[0].mxu0
    %v384 = vadd.f32 %v260, %v383
    %v385 = vpop.f32.mrb[0].mxu0
    %386 = vmatprep.mubr.f32.mxu0 0.0
    %387 = vmatmul.mubr.f32.gmra.mrb[0].mxu0 %v285
    %v388 = vpop.f32.mrb[0].mxu0
    %v389 = vadd.f32 %v260, %v388
    %v390 = vpop.f32.mrb[0].mxu0
    %391 = vdwg.mxu0
    %v392 = vmax.f32 %v354, 0.0
    %v393 = vmax.f32 %v359, 0.0
    %v394 = vmax.f32 %v364, 0.0
    %v395 = vmax.f32 %v369, 0.0
    %v396 = vmax.f32 %v374, 0.0
    %v397 = vmax.f32 %v379, 0.0
    %v398 = vmax.f32 %v384, 0.0
    %v399 = vmax.f32 %v389, 0.0
    %v400 = vld [vmem:[#allocation6] sm:$0xff]
    %v401 = vld [vmem:[#allocation6 + $0x8] sm:$0xff]
    %vm402 = vcmask 130048
    %v404 = vsel %vm402, %v392, 0
    %v407 = vsel %vm402, %v393, 0
    %v410 = vsel %vm402, %v394, 0
    %v413 = vsel %vm402, %v395, 0
    %v416 = vsel %vm402, %v396, 0
    %v419 = vsel %vm402, %v397, 0
    %v422 = vsel %vm402, %v398, 0
    %v425 = vsel %vm402, %v399, 0
    %427 = vmatprep.subr.mxu0 0.0
    %428 = vmatpush1.msra.mxu0 %v400
    %429 = vmatprep.subr.mxu0 0.0
    %430 = vmatpush1.msra.mxu0 %v401
    %431 = vmatprep.subr.mxu0 0.0
    %432 = vmatpush1.msra.mxu0 0.0
    %433 = vmatprep.subr.mxu0 0.0
    %434 = vmatpush1.msra.mxu0 0.0
    %435 = vmatprep.subr.mxu0 0.0
    %436 = vmatpush1.msra.mxu0 0.0
    %437 = vmatprep.subr.mxu0 0.0
    %438 = vmatpush1.msra.mxu0 0.0
    %439 = vmatprep.subr.mxu0 0.0
    %440 = vmatpush1.msra.mxu0 0.0
    %441 = vmatprep.subr.mxu0 0.0
    %442 = vmatpush1.msra.mxu0 0.0
    %443 = vmatprep.subr.mxu0 0.0
    %444 = vmatpush1.msra.mxu0 0.0
    %445 = vmatprep.subr.mxu0 0.0
    %446 = vmatpush1.msra.mxu0 0.0
    %447 = vmatprep.subr.mxu0 0.0
    %448 = vmatpush1.msra.mxu0 0.0
    %449 = vmatprep.subr.mxu0 0.0
    %450 = vmatpush1.msra.mxu0 0.0
    %451 = vmatprep.subr.mxu0 0.0
    %452 = vmatpush1.msra.mxu0 0.0
    %453 = vmatprep.subr.mxu0 0.0
    %454 = vmatpush1.msra.mxu0 0.0
    %455 = vmatprep.subr.mxu0 0.0
    %456 = vmatpush1.msra.mxu0 0.0
    %457 = vmatprep.subr.mxu0 0.0
    %458 = vmatpush1.msra.mxu0 0.0
    %459 = vmatprep.subr.mxu0 0.0
    %460 = vmatpush1.msra.mxu0 0.0
    %461 = vmatprep.subr.mxu0 0.0
    %462 = vmatpush1.msra.mxu0 0.0
    %463 = vmatprep.subr.mxu0 0.0
    %464 = vmatpush1.msra.mxu0 0.0
    %465 = vmatprep.subr.mxu0 0.0
    %466 = vmatpush1.msra.mxu0 0.0
    %467 = vmatprep.subr.mxu0 0.0
    %468 = vmatpush1.msra.mxu0 0.0
    %469 = vmatprep.subr.mxu0 0.0
    %470 = vmatpush1.msra.mxu0 0.0
    %471 = vmatprep.subr.mxu0 0.0
    %472 = vmatpush1.msra.mxu0 0.0
    %473 = vmatprep.subr.mxu0 0.0
    %474 = vmatpush1.msra.mxu0 0.0
    %475 = vmatprep.subr.mxu0 0.0
    %476 = vmatpush1.msra.mxu0 0.0
    %477 = vmatprep.subr.mxu0 0.0
    %478 = vmatpush1.msra.mxu0 0.0
    %479 = vmatprep.subr.mxu0 0.0
    %480 = vmatpush1.msra.mxu0 0.0
    %481 = vmatprep.subr.mxu0 0.0
    %482 = vmatpush1.msra.mxu0 0.0
    %483 = vmatprep.subr.mxu0 0.0
    %484 = vmatpush1.msra.mxu0 0.0
    %485 = vmatprep.subr.mxu0 0.0
    %486 = vmatpush1.msra.mxu0 0.0
    %487 = vmatprep.subr.mxu0 0.0
    %488 = vmatpush1.msra.mxu0 0.0
    %489 = vmatprep.subr.mxu0 0.0
    %490 = vmatpush1.msra.mxu0 0.0
    %491 = vmatprep.mubr.f32.mxu0 0.0
    %492 = vmatmul.mubr.f32.gmra.mrb[0].mxu0 %v404
    %v493 = vpop.f32.mrb[0].mxu0
    %v494 = vadd.f32 0.0, %v493
    %v495 = vpop.f32.mrb[0].mxu0
    %496 = vmatprep.mubr.f32.mxu0 0.0
    %497 = vmatmul.mubr.f32.gmra.mrb[0].mxu0 %v407
    %v498 = vpop.f32.mrb[0].mxu0
    %v499 = vadd.f32 0.0, %v498
    %v500 = vpop.f32.mrb[0].mxu0
    %501 = vmatprep.mubr.f32.mxu0 0.0
    %502 = vmatmul.mubr.f32.gmra.mrb[0].mxu0 %v410
    %v503 = vpop.f32.mrb[0].mxu0
    %v504 = vadd.f32 0.0, %v503
    %v505 = vpop.f32.mrb[0].mxu0
    %506 = vmatprep.mubr.f32.mxu0 0.0
    %507 = vmatmul.mubr.f32.gmra.mrb[0].mxu0 %v413
    %v508 = vpop.f32.mrb[0].mxu0
    %v509 = vadd.f32 0.0, %v508
    %v510 = vpop.f32.mrb[0].mxu0
    %511 = vmatprep.mubr.f32.mxu0 0.0
    %512 = vmatmul.mubr.f32.gmra.mrb[0].mxu0 %v416
    %v513 = vpop.f32.mrb[0].mxu0
    %v514 = vadd.f32 0.0, %v513
    %v515 = vpop.f32.mrb[0].mxu0
    %516 = vmatprep.mubr.f32.mxu0 0.0
    %517 = vmatmul.mubr.f32.gmra.mrb[0].mxu0 %v419
    %v518 = vpop.f32.mrb[0].mxu0
    %v519 = vadd.f32 0.0, %v518
    %v520 = vpop.f32.mrb[0].mxu0
    %521 = vmatprep.mubr.f32.mxu0 0.0
    %522 = vmatmul.mubr.f32.gmra.mrb[0].mxu0 %v422
    %v523 = vpop.f32.mrb[0].mxu0
    %v524 = vadd.f32 0.0, %v523
    %v525 = vpop.f32.mrb[0].mxu0
    %526 = vmatprep.mubr.f32.mxu0 0.0
    %527 = vmatmul.mubr.f32.gmra.mrb[0].mxu0 %v425
    %v528 = vpop.f32.mrb[0].mxu0
    %v529 = vadd.f32 0.0, %v528
    %v530 = vpop.f32.mrb[0].mxu0
    %531 = vdwg.mxu0
    %v532 = vpack.c.bf16 %v499, %v494
    %v533 = vpack.c.bf16 %v509, %v504
    %v534 = vpack.c.bf16 %v519, %v514
    %v535 = vpack.c.bf16 %v529, %v524
    %v536 = vld [vmem:[#allocation8] sm:$0x1]
    %v538 = vlaneseq
    %v539 = vshrl.u32 %v538, 7
    %v540 = vsub.s32 0, %v539
    %v541 = vrot.slane %v536, %v540
    %543 = vmatprep.subr.bf16.mxu0 0
    %544 = vmatpush1.bf16.msra.mxu0 %v532
    %545 = vmatprep.subr.bf16.mxu0 0
    %546 = vmatpush1.bf16.msra.mxu0 %v533
    %547 = vmatprep.subr.bf16.mxu0 0
    %548 = vmatpush1.bf16.msra.mxu0 %v534
    %549 = vmatprep.subr.bf16.mxu0 0
    %550 = vmatpush1.bf16.msra.mxu0 %v535
    %551 = vmatprep.subr.bf16.mxu0 0
    %552 = vmatpush1.bf16.msra.mxu0 0
    %553 = vmatprep.subr.bf16.mxu0 0
    %554 = vmatpush1.bf16.msra.mxu0 0
    %555 = vmatprep.subr.bf16.mxu0 0
    %556 = vmatpush1.bf16.msra.mxu0 0
    %557 = vmatprep.subr.bf16.mxu0 0
    %558 = vmatpush1.bf16.msra.mxu0 0
    %559 = vmatprep.subr.bf16.mxu0 0
    %560 = vmatpush1.bf16.msra.mxu0 0
    %561 = vmatprep.subr.bf16.mxu0 0
    %562 = vmatpush1.bf16.msra.mxu0 0
    %563 = vmatprep.subr.bf16.mxu0 0
    %564 = vmatpush1.bf16.msra.mxu0 0
    %565 = vmatprep.subr.bf16.mxu0 0
    %566 = vmatpush1.bf16.msra.mxu0 0
    %567 = vmatprep.subr.bf16.mxu0 0
    %568 = vmatpush1.bf16.msra.mxu0 0
    %569 = vmatprep.subr.bf16.mxu0 0
    %570 = vmatpush1.bf16.msra.mxu0 0
    %571 = vmatprep.subr.bf16.mxu0 0
    %572 = vmatpush1.bf16.msra.mxu0 0
    %573 = vmatprep.subr.bf16.mxu0 0
    %574 = vmatpush1.bf16.msra.mxu0 0
    %575 = vmatprep.mubr.bf16.mxu0 0
    %576 = vmatmul.mubr.bf16.gmra.mrb[0].mxu0 %v178
    %v577 = vpop.f32.mrb[0].mxu0
    %v578 = vadd.f32 %v541, %v577
    %v579 = vpop.f32.mrb[0].mxu0
    %v580 = vpop.f32.mrb[0].mxu0
    %v581 = vadd.f32 %v541, %v580
    %v582 = vpop.f32.mrb[0].mxu0
    %583 = vmatprep.mubr.bf16.mxu0 0
    %584 = vmatmul.mubr.bf16.gmra.mrb[0].mxu0 %v181
    %v585 = vpop.f32.mrb[0].mxu0
    %v586 = vadd.f32 %v541, %v585
    %v587 = vpop.f32.mrb[0].mxu0
    %v588 = vpop.f32.mrb[0].mxu0
    %v589 = vadd.f32 %v541, %v588
    %v590 = vpop.f32.mrb[0].mxu0
    %591 = vmatprep.mubr.bf16.mxu0 0
    %592 = vmatmul.mubr.bf16.gmra.mrb[0].mxu0 %v184
    %v593 = vpop.f32.mrb[0].mxu0
    %v594 = vadd.f32 %v541, %v593
    %v595 = vpop.f32.mrb[0].mxu0
    %v596 = vpop.f32.mrb[0].mxu0
    %v597 = vadd.f32 %v541, %v596
    %v598 = vpop.f32.mrb[0].mxu0
    %599 = vmatprep.mubr.bf16.mxu0 0
    %600 = vmatmul.mubr.bf16.gmra.mrb[0].mxu0 %v187
    %v601 = vpop.f32.mrb[0].mxu0
    %v602 = vadd.f32 %v541, %v601
    %v603 = vpop.f32.mrb[0].mxu0
    %v604 = vpop.f32.mrb[0].mxu0
    %v605 = vadd.f32 %v541, %v604
    %v606 = vpop.f32.mrb[0].mxu0
    %607 = vdwg.mxu0
    %v608 = vmax.f32 %v578, 0.0
    %v609 = vmax.f32 %v581, 0.0
    %v610 = vmax.f32 %v586, 0.0
    %v611 = vmax.f32 %v589, 0.0
    %v612 = vmax.f32 %v594, 0.0
    %v613 = vmax.f32 %v597, 0.0
    %v614 = vmax.f32 %v602, 0.0
    %v615 = vmax.f32 %v605, 0.0
    %v616 = vld [vmem:[#allocation9] sm:$0xff]
    %v617 = vld [vmem:[#allocation9 + $0x8] sm:$0xff]
    %v618 = vld [vmem:[%s7] sm:$0xff]
    %v619 = vld [vmem:[%s7 + $0x8] sm:$0xff]
    %v620 = vld [vmem:[%s7 + $0x10] sm:$0xff]
    %v621 = vld [vmem:[%s7 + $0x18] sm:$0xff]
    %v622 = vld [vmem:[#allocation11] sm:$0x1]
    %v623 = vld [vmem:[#allocation12] sm:$0xff]
    %v624 = vld [vmem:[#allocation12 + $0x8] sm:$0xff]
    %v625 = vld [vmem:[%s10] sm:$0xff]
    %v626 = vld [vmem:[%s10 + $0x8] sm:$0xff]
    %v627 = vld [vmem:[%s10 + $0x10] sm:$0xff]
    %v628 = vld [vmem:[%s10 + $0x18] sm:$0xff]
    %v629 = vld [vmem:[%s11] sm:$0x1]
    %v631 = vlaneseq
    %v632 = vshrl.u32 %v631, 7
    %v633 = vsub.s32 0, %v632
    %v634 = vrot.slane %v622, %v633
    %636 = vmatprep.subr.mxu0 0.0
    %637 = vmatpush1.msra.mxu0 %v616
    %638 = vmatprep.subr.mxu0 0.0
    %639 = vmatpush1.msra.mxu0 %v617
    %640 = vmatprep.subr.mxu0 0.0
    %641 = vmatpush1.msra.mxu0 0.0
    %642 = vmatprep.subr.mxu0 0.0
    %643 = vmatpush1.msra.mxu0 0.0
    %644 = vmatprep.subr.mxu0 0.0
    %645 = vmatpush1.msra.mxu0 0.0
    %646 = vmatprep.subr.mxu0 0.0
    %647 = vmatpush1.msra.mxu0 0.0
    %648 = vmatprep.subr.mxu0 0.0
    %649 = vmatpush1.msra.mxu0 0.0
    %650 = vmatprep.subr.mxu0 0.0
    %651 = vmatpush1.msra.mxu0 0.0
    %652 = vmatprep.subr.mxu0 0.0
    %653 = vmatpush1.msra.mxu0 0.0
    %654 = vmatprep.subr.mxu0 0.0
    %655 = vmatpush1.msra.mxu0 0.0
    %656 = vmatprep.subr.mxu0 0.0
    %657 = vmatpush1.msra.mxu0 0.0
    %658 = vmatprep.subr.mxu0 0.0
    %659 = vmatpush1.msra.mxu0 0.0
    %660 = vmatprep.subr.mxu0 0.0
    %661 = vmatpush1.msra.mxu0 0.0
    %662 = vmatprep.subr.mxu0 0.0
    %663 = vmatpush1.msra.mxu0 0.0
    %664 = vmatprep.subr.mxu0 0.0
    %665 = vmatpush1.msra.mxu0 0.0
    %666 = vmatprep.subr.mxu0 0.0
    %667 = vmatpush1.msra.mxu0 0.0
    %668 = vmatprep.subr.mxu0 0.0
    %669 = vmatpush1.msra.mxu0 0.0
    %670 = vmatprep.subr.mxu0 0.0
    %671 = vmatpush1.msra.mxu0 0.0
    %672 = vmatprep.subr.mxu0 0.0
    %673 = vmatpush1.msra.mxu0 0.0
    %674 = vmatprep.subr.mxu0 0.0
    %675 = vmatpush1.msra.mxu0 0.0
    %676 = vmatprep.subr.mxu0 0.0
    %677 = vmatpush1.msra.mxu0 0.0
    %678 = vmatprep.subr.mxu0 0.0
    %679 = vmatpush1.msra.mxu0 0.0
    %680 = vmatprep.subr.mxu0 0.0
    %681 = vmatpush1.msra.mxu0 0.0
    %682 = vmatprep.subr.mxu0 0.0
    %683 = vmatpush1.msra.mxu0 0.0
    %684 = vmatprep.subr.mxu0 0.0
    %685 = vmatpush1.msra.mxu0 0.0
    %686 = vmatprep.subr.mxu0 0.0
    %687 = vmatpush1.msra.mxu0 0.0
    %688 = vmatprep.subr.mxu0 0.0
    %689 = vmatpush1.msra.mxu0 0.0
    %690 = vmatprep.subr.mxu0 0.0
    %691 = vmatpush1.msra.mxu0 0.0
    %692 = vmatprep.subr.mxu0 0.0
    %693 = vmatpush1.msra.mxu0 0.0
    %694 = vmatprep.subr.mxu0 0.0
    %695 = vmatpush1.msra.mxu0 0.0
    %696 = vmatprep.subr.mxu0 0.0
    %697 = vmatpush1.msra.mxu0 0.0
    %698 = vmatprep.subr.mxu0 0.0
    %699 = vmatpush1.msra.mxu0 0.0
    %700 = vmatprep.mubr.f32.mxu0 0.0
    %701 = vmatmul.mubr.f32.gmra.mrb[0].mxu0 %v404
    %v702 = vpop.f32.mrb[0].mxu0
    %v703 = vadd.f32 %v634, %v702
    %v704 = vpop.f32.mrb[0].mxu0
    %705 = vmatprep.mubr.f32.mxu0 0.0
    %706 = vmatmul.mubr.f32.gmra.mrb[0].mxu0 %v407
    %v707 = vpop.f32.mrb[0].mxu0
    %v708 = vadd.f32 %v634, %v707
    %v709 = vpop.f32.mrb[0].mxu0
    %710 = vmatprep.mubr.f32.mxu0 0.0
    %711 = vmatmul.mubr.f32.gmra.mrb[0].mxu0 %v410
    %v712 = vpop.f32.mrb[0].mxu0
    %v713 = vadd.f32 %v634, %v712
    %v714 = vpop.f32.mrb[0].mxu0
    %715 = vmatprep.mubr.f32.mxu0 0.0
    %716 = vmatmul.mubr.f32.gmra.mrb[0].mxu0 %v413
    %v717 = vpop.f32.mrb[0].mxu0
    %v718 = vadd.f32 %v634, %v717
    %v719 = vpop.f32.mrb[0].mxu0
    %720 = vmatprep.mubr.f32.mxu0 0.0
    %721 = vmatmul.mubr.f32.gmra.mrb[0].mxu0 %v416
    %v722 = vpop.f32.mrb[0].mxu0
    %v723 = vadd.f32 %v634, %v722
    %v724 = vpop.f32.mrb[0].mxu0
    %725 = vmatprep.mubr.f32.mxu0 0.0
    %726 = vmatmul.mubr.f32.gmra.mrb[0].mxu0 %v419
    %v727 = vpop.f32.mrb[0].mxu0
    %v728 = vadd.f32 %v634, %v727
    %v729 = vpop.f32.mrb[0].mxu0
    %730 = vmatprep.mubr.f32.mxu0 0.0
    %731 = vmatmul.mubr.f32.gmra.mrb[0].mxu0 %v422
    %v732 = vpop.f32.mrb[0].mxu0
    %v733 = vadd.f32 %v634, %v732
    %v734 = vpop.f32.mrb[0].mxu0
    %735 = vmatprep.mubr.f32.mxu0 0.0
    %736 = vmatmul.mubr.f32.gmra.mrb[0].mxu0 %v425
    %v737 = vpop.f32.mrb[0].mxu0
    %v738 = vadd.f32 %v634, %v737
    %v739 = vpop.f32.mrb[0].mxu0
    %740 = vdwg.mxu0
    %v741 = vxor.u32 %v703, 2147483648
    %v742 = vxor.u32 %v708, 2147483648
    %v743 = vxor.u32 %v713, 2147483648
    %v744 = vxor.u32 %v718, 2147483648
    %v745 = vxor.u32 %v723, 2147483648
    %v746 = vxor.u32 %v728, 2147483648
    %v747 = vxor.u32 %v733, 2147483648
    %v748 = vxor.u32 %v738, 2147483648
    %v749 = vmul.f32 %v741, 1.442695
    %v750 = vpow.pop %v749
    %v751 = vmul.f32 %v742, 1.442695
    %v752 = vpow.pop %v751
    %v753 = vmul.f32 %v743, 1.442695
    %v754 = vpow.pop %v753
    %v755 = vmul.f32 %v744, 1.442695
    %v756 = vpow.pop %v755
    %v757 = vmul.f32 %v745, 1.442695
    %v758 = vpow.pop %v757
    %v759 = vmul.f32 %v746, 1.442695
    %v760 = vpow.pop %v759
    %v761 = vmul.f32 %v747, 1.442695
    %v762 = vpow.pop %v761
    %v763 = vmul.f32 %v748, 1.442695
    %v764 = vpow.pop %v763
    %v765 = vadd.f32 %v750, 1.0
    %v766 = vadd.f32 %v752, 1.0
    %v767 = vadd.f32 %v754, 1.0
    %v768 = vadd.f32 %v756, 1.0
    %v769 = vadd.f32 %v758, 1.0
    %v770 = vadd.f32 %v760, 1.0
    %v771 = vadd.f32 %v762, 1.0
    %v772 = vadd.f32 %v764, 1.0
    %v773 = vrcp.pop %v765
    %v774 = vmul.f32 1.0, %v773
    %v775 = vrcp.pop %v766
    %v776 = vmul.f32 1.0, %v775
    %v777 = vrcp.pop %v767
    %v778 = vmul.f32 1.0, %v777
    %v779 = vrcp.pop %v768
    %v780 = vmul.f32 1.0, %v779
    %v781 = vrcp.pop %v769
    %v782 = vmul.f32 1.0, %v781
    %v783 = vrcp.pop %v770
    %v784 = vmul.f32 1.0, %v783
    %v785 = vrcp.pop %v771
    %v786 = vmul.f32 1.0, %v785
    %v787 = vrcp.pop %v772
    %v788 = vmul.f32 1.0, %v787
    %v789 = vtanh.pop %v703
    %v790 = vtanh.pop %v708
    %v791 = vtanh.pop %v713
    %v792 = vtanh.pop %v718
    %v793 = vtanh.pop %v723
    %v794 = vtanh.pop %v728
    %v795 = vtanh.pop %v733
    %v796 = vtanh.pop %v738
    %805 = vrot.lane.b32.xlu0 %v789, 32
    %v806 = vpop.permute.xlu0 %805
    %807 = vrot.lane.b32.xlu0 %v790, 32
    %v808 = vpop.permute.xlu0 %807
    %809 = vrot.lane.b32.xlu0 %v791, 32
    %v810 = vpop.permute.xlu0 %809
    %811 = vrot.lane.b32.xlu0 %v792, 32
    %v812 = vpop.permute.xlu0 %811
    %813 = vrot.lane.b32.xlu0 %v793, 32
    %v814 = vpop.permute.xlu0 %813
    %815 = vrot.lane.b32.xlu0 %v794, 32
    %v816 = vpop.permute.xlu0 %815
    %817 = vrot.lane.b32.xlu0 %v795, 32
    %v818 = vpop.permute.xlu0 %817
    %819 = vrot.lane.b32.xlu0 %v796, 32
    %v820 = vpop.permute.xlu0 %819
    %v829 = vmul.f32 %v774, %v806
    %v830 = vmul.f32 %v776, %v808
    %v831 = vmul.f32 %v778, %v810
    %v832 = vmul.f32 %v780, %v812
    %v833 = vmul.f32 %v782, %v814
    %v834 = vmul.f32 %v784, %v816
    %v835 = vmul.f32 %v786, %v818
    %v836 = vmul.f32 %v788, %v820
    %v837 = vtanh.pop %v829
    %v838 = vtanh.pop %v830
    %v839 = vtanh.pop %v831
    %v840 = vtanh.pop %v832
    %v841 = vtanh.pop %v833
    %v842 = vtanh.pop %v834
    %v843 = vtanh.pop %v835
    %v844 = vtanh.pop %v836
    %853 = vrot.lane.b32.xlu0 %v837, 64
    %v854 = vpop.permute.xlu0 %853
    %855 = vrot.lane.b32.xlu0 %v838, 64
    %v856 = vpop.permute.xlu0 %855
    %857 = vrot.lane.b32.xlu0 %v839, 64
    %v858 = vpop.permute.xlu0 %857
    %859 = vrot.lane.b32.xlu0 %v840, 64
    %v860 = vpop.permute.xlu0 %859
    %861 = vrot.lane.b32.xlu0 %v841, 64
    %v862 = vpop.permute.xlu0 %861
    %863 = vrot.lane.b32.xlu0 %v842, 64
    %v864 = vpop.permute.xlu0 %863
    %865 = vrot.lane.b32.xlu0 %v843, 64
    %v866 = vpop.permute.xlu0 %865
    %867 = vrot.lane.b32.xlu0 %v844, 64
    %v868 = vpop.permute.xlu0 %867
    %v877 = vmul.f32 %v774, %v854
    %v878 = vmul.f32 %v776, %v856
    %v879 = vmul.f32 %v778, %v858
    %v880 = vmul.f32 %v780, %v860
    %v881 = vmul.f32 %v782, %v862
    %v882 = vmul.f32 %v784, %v864
    %v883 = vmul.f32 %v786, %v866
    %v884 = vmul.f32 %v788, %v868
    %893 = vrot.lane.b32.xlu0 %v877, 64
    %v894 = vpop.permute.xlu0 %893
    %895 = vrot.lane.b32.xlu0 %v878, 64
    %v896 = vpop.permute.xlu0 %895
    %897 = vrot.lane.b32.xlu0 %v879, 64
    %v898 = vpop.permute.xlu0 %897
    %899 = vrot.lane.b32.xlu0 %v880, 64
    %v900 = vpop.permute.xlu0 %899
    %901 = vrot.lane.b32.xlu0 %v881, 64
    %v902 = vpop.permute.xlu0 %901
    %903 = vrot.lane.b32.xlu0 %v882, 64
    %v904 = vpop.permute.xlu0 %903
    %905 = vrot.lane.b32.xlu0 %v883, 64
    %v906 = vpop.permute.xlu0 %905
    %907 = vrot.lane.b32.xlu0 %v884, 64
    %v908 = vpop.permute.xlu0 %907
    %vm909 = vcmask 261120
    %v910 = vsel %vm909, %v894, 0
    %v912 = vsel %vm909, %v896, 0
    %v914 = vsel %vm909, %v898, 0
    %v916 = vsel %vm909, %v900, 0
    %v918 = vsel %vm909, %v902, 0
    %v920 = vsel %vm909, %v904, 0
    %v922 = vsel %vm909, %v906, 0
    %v924 = vsel %vm909, %v908, 0
    %926 = vmatprep.subr.mxu0 0.0
    %927 = vmatpush1.msra.mxu0 %v618
    %928 = vmatprep.subr.mxu0 0.0
    %929 = vmatpush1.msra.mxu0 %v619
    %930 = vmatprep.subr.mxu0 0.0
    %931 = vmatpush1.msra.mxu0 %v620
    %932 = vmatprep.subr.mxu0 0.0
    %933 = vmatpush1.msra.mxu0 %v621
    %934 = vmatprep.subr.mxu0 0.0
    %935 = vmatpush1.msra.mxu0 0.0
    %936 = vmatprep.subr.mxu0 0.0
    %937 = vmatpush1.msra.mxu0 0.0
    %938 = vmatprep.subr.mxu0 0.0
    %939 = vmatpush1.msra.mxu0 0.0
    %940 = vmatprep.subr.mxu0 0.0
    %941 = vmatpush1.msra.mxu0 0.0
    %942 = vmatprep.subr.mxu0 0.0
    %943 = vmatpush1.msra.mxu0 0.0
    %944 = vmatprep.subr.mxu0 0.0
    %945 = vmatpush1.msra.mxu0 0.0
    %946 = vmatprep.subr.mxu0 0.0
    %947 = vmatpush1.msra.mxu0 0.0
    %948 = vmatprep.subr.mxu0 0.0
    %949 = vmatpush1.msra.mxu0 0.0
    %950 = vmatprep.subr.mxu0 0.0
    %951 = vmatpush1.msra.mxu0 0.0
    %952 = vmatprep.subr.mxu0 0.0
    %953 = vmatpush1.msra.mxu0 0.0
    %954 = vmatprep.subr.mxu0 0.0
    %955 = vmatpush1.msra.mxu0 0.0
    %956 = vmatprep.subr.mxu0 0.0
    %957 = vmatpush1.msra.mxu0 0.0
    %958 = vmatprep.subr.mxu0 0.0
    %959 = vmatpush1.msra.mxu0 0.0
    %960 = vmatprep.subr.mxu0 0.0
    %961 = vmatpush1.msra.mxu0 0.0
    %962 = vmatprep.subr.mxu0 0.0
    %963 = vmatpush1.msra.mxu0 0.0
    %964 = vmatprep.subr.mxu0 0.0
    %965 = vmatpush1.msra.mxu0 0.0
    %966 = vmatprep.subr.mxu0 0.0
    %967 = vmatpush1.msra.mxu0 0.0
    %968 = vmatprep.subr.mxu0 0.0
    %969 = vmatpush1.msra.mxu0 0.0
    %970 = vmatprep.subr.mxu0 0.0
    %971 = vmatpush1.msra.mxu0 0.0
    %972 = vmatprep.subr.mxu0 0.0
    %973 = vmatpush1.msra.mxu0 0.0
    %974 = vmatprep.subr.mxu0 0.0
    %975 = vmatpush1.msra.mxu0 0.0
    %976 = vmatprep.subr.mxu0 0.0
    %977 = vmatpush1.msra.mxu0 0.0
    %978 = vmatprep.subr.mxu0 0.0
    %979 = vmatpush1.msra.mxu0 0.0
    %980 = vmatprep.subr.mxu0 0.0
    %981 = vmatpush1.msra.mxu0 0.0
    %982 = vmatprep.subr.mxu0 0.0
    %983 = vmatpush1.msra.mxu0 0.0
    %984 = vmatprep.subr.mxu0 0.0
    %985 = vmatpush1.msra.mxu0 0.0
    %986 = vmatprep.subr.mxu0 0.0
    %987 = vmatpush1.msra.mxu0 0.0
    %988 = vmatprep.subr.mxu0 0.0
    %989 = vmatpush1.msra.mxu0 0.0
    %990 = vmatprep.mubr.f32.mxu0 0.0
    %991 = vmatmul.mubr.f32.gmra.mrb[0].mxu0 %v910
    %v992 = vpop.f32.mrb[0].mxu0
    %v993 = vadd.f32 0.0, %v992
    %v994 = vpop.f32.mrb[0].mxu0
    %995 = vmatprep.mubr.f32.mxu0 0.0
    %996 = vmatmul.mubr.f32.gmra.mrb[0].mxu0 %v912
    %v997 = vpop.f32.mrb[0].mxu0
    %v998 = vadd.f32 0.0, %v997
    %v999 = vpop.f32.mrb[0].mxu0
    %1000 = vmatprep.mubr.f32.mxu0 0.0
    %1001 = vmatmul.mubr.f32.gmra.mrb[0].mxu0 %v914
    %v1002 = vpop.f32.mrb[0].mxu0
    %v1003 = vadd.f32 0.0, %v1002
    %v1004 = vpop.f32.mrb[0].mxu0
    %1005 = vmatprep.mubr.f32.mxu0 0.0
    %1006 = vmatmul.mubr.f32.gmra.mrb[0].mxu0 %v916
    %v1007 = vpop.f32.mrb[0].mxu0
    %v1008 = vadd.f32 0.0, %v1007
    %v1009 = vpop.f32.mrb[0].mxu0
    %1010 = vmatprep.mubr.f32.mxu0 0.0
    %1011 = vmatmul.mubr.f32.gmra.mrb[0].mxu0 %v918
    %v1012 = vpop.f32.mrb[0].mxu0
    %v1013 = vadd.f32 0.0, %v1012
    %v1014 = vpop.f32.mrb[0].mxu0
    %1015 = vmatprep.mubr.f32.mxu0 0.0
    %1016 = vmatmul.mubr.f32.gmra.mrb[0].mxu0 %v920
    %v1017 = vpop.f32.mrb[0].mxu0
    %v1018 = vadd.f32 0.0, %v1017
    %v1019 = vpop.f32.mrb[0].mxu0
    %1020 = vmatprep.mubr.f32.mxu0 0.0
    %1021 = vmatmul.mubr.f32.gmra.mrb[0].mxu0 %v922
    %v1022 = vpop.f32.mrb[0].mxu0
    %v1023 = vadd.f32 0.0, %v1022
    %v1024 = vpop.f32.mrb[0].mxu0
    %1025 = vmatprep.mubr.f32.mxu0 0.0
    %1026 = vmatmul.mubr.f32.gmra.mrb[0].mxu0 %v924
    %v1027 = vpop.f32.mrb[0].mxu0
    %v1028 = vadd.f32 0.0, %v1027
    %v1029 = vpop.f32.mrb[0].mxu0
    %1030 = vdwg.mxu0
    %v1032 = vsel %vm402, %v608, 0
    %v1035 = vsel %vm402, %v609, 0
    %v1038 = vsel %vm402, %v610, 0
    %v1041 = vsel %vm402, %v611, 0
    %v1044 = vsel %vm402, %v612, 0
    %v1047 = vsel %vm402, %v613, 0
    %v1050 = vsel %vm402, %v614, 0
    %v1053 = vsel %vm402, %v615, 0
    %1055 = vmatprep.subr.mxu0 0.0
    %1056 = vmatpush1.msra.mxu0 %v616
    %1057 = vmatprep.subr.mxu0 0.0
    %1058 = vmatpush1.msra.mxu0 %v617
    %1059 = vmatprep.subr.mxu0 0.0
    %1060 = vmatpush1.msra.mxu0 0.0
    %1061 = vmatprep.subr.mxu0 0.0
    %1062 = vmatpush1.msra.mxu0 0.0
    %1063 = vmatprep.subr.mxu0 0.0
    %1064 = vmatpush1.msra.mxu0 0.0
    %1065 = vmatprep.subr.mxu0 0.0
    %1066 = vmatpush1.msra.mxu0 0.0
    %1067 = vmatprep.subr.mxu0 0.0
    %1068 = vmatpush1.msra.mxu0 0.0
    %1069 = vmatprep.subr.mxu0 0.0
    %1070 = vmatpush1.msra.mxu0 0.0
    %1071 = vmatprep.subr.mxu0 0.0
    %1072 = vmatpush1.msra.mxu0 0.0
    %1073 = vmatprep.subr.mxu0 0.0
    %1074 = vmatpush1.msra.mxu0 0.0
    %1075 = vmatprep.subr.mxu0 0.0
    %1076 = vmatpush1.msra.mxu0 0.0
    %1077 = vmatprep.subr.mxu0 0.0
    %1078 = vmatpush1.msra.mxu0 0.0
    %1079 = vmatprep.subr.mxu0 0.0
    %1080 = vmatpush1.msra.mxu0 0.0
    %1081 = vmatprep.subr.mxu0 0.0
    %1082 = vmatpush1.msra.mxu0 0.0
    %1083 = vmatprep.subr.mxu0 0.0
    %1084 = vmatpush1.msra.mxu0 0.0
    %1085 = vmatprep.subr.mxu0 0.0
    %1086 = vmatpush1.msra.mxu0 0.0
    %1087 = vmatprep.subr.mxu0 0.0
    %1088 = vmatpush1.msra.mxu0 0.0
    %1089 = vmatprep.subr.mxu0 0.0
    %1090 = vmatpush1.msra.mxu0 0.0
    %1091 = vmatprep.subr.mxu0 0.0
    %1092 = vmatpush1.msra.mxu0 0.0
    %1093 = vmatprep.subr.mxu0 0.0
    %1094 = vmatpush1.msra.mxu0 0.0
    %1095 = vmatprep.subr.mxu0 0.0
    %1096 = vmatpush1.msra.mxu0 0.0
    %1097 = vmatprep.subr.mxu0 0.0
    %1098 = vmatpush1.msra.mxu0 0.0
    %1099 = vmatprep.subr.mxu0 0.0
    %1100 = vmatpush1.msra.mxu0 0.0
    %1101 = vmatprep.subr.mxu0 0.0
    %1102 = vmatpush1.msra.mxu0 0.0
    %1103 = vmatprep.subr.mxu0 0.0
    %1104 = vmatpush1.msra.mxu0 0.0
    %1105 = vmatprep.subr.mxu0 0.0
    %1106 = vmatpush1.msra.mxu0 0.0
    %1107 = vmatprep.subr.mxu0 0.0
    %1108 = vmatpush1.msra.mxu0 0.0
    %1109 = vmatprep.subr.mxu0 0.0
    %1110 = vmatpush1.msra.mxu0 0.0
    %1111 = vmatprep.subr.mxu0 0.0
    %1112 = vmatpush1.msra.mxu0 0.0
    %1113 = vmatprep.subr.mxu0 0.0
    %1114 = vmatpush1.msra.mxu0 0.0
    %1115 = vmatprep.subr.mxu0 0.0
    %1116 = vmatpush1.msra.mxu0 0.0
    %1117 = vmatprep.subr.mxu0 0.0
    %1118 = vmatpush1.msra.mxu0 0.0
    %1119 = vmatprep.mubr.f32.mxu0 0.0
    %1120 = vmatmul.mubr.f32.gmra.mrb[0].mxu0 %v1032
    %v1121 = vpop.f32.mrb[0].mxu0
    %v1122 = vadd.f32 %v993, %v1121
    %v1123 = vpop.f32.mrb[0].mxu0
    %1124 = vmatprep.mubr.f32.mxu0 0.0
    %1125 = vmatmul.mubr.f32.gmra.mrb[0].mxu0 %v1035
    %v1126 = vpop.f32.mrb[0].mxu0
    %v1127 = vadd.f32 %v998, %v1126
    %v1128 = vpop.f32.mrb[0].mxu0
    %1129 = vmatprep.mubr.f32.mxu0 0.0
    %1130 = vmatmul.mubr.f32.gmra.mrb[0].mxu0 %v1038
    %v1131 = vpop.f32.mrb[0].mxu0
    %v1132 = vadd.f32 %v1003, %v1131
    %v1133 = vpop.f32.mrb[0].mxu0
    %1134 = vmatprep.mubr.f32.mxu0 0.0
    %1135 = vmatmul.mubr.f32.gmra.mrb[0].mxu0 %v1041
    %v1136 = vpop.f32.mrb[0].mxu0
    %v1137 = vadd.f32 %v1008, %v1136
    %v1138 = vpop.f32.mrb[0].mxu0
    %1139 = vmatprep.mubr.f32.mxu0 0.0
    %1140 = vmatmul.mubr.f32.gmra.mrb[0].mxu0 %v1044
    %v1141 = vpop.f32.mrb[0].mxu0
    %v1142 = vadd.f32 %v1013, %v1141
    %v1143 = vpop.f32.mrb[0].mxu0
    %1144 = vmatprep.mubr.f32.mxu0 0.0
    %1145 = vmatmul.mubr.f32.gmra.mrb[0].mxu0 %v1047
    %v1146 = vpop.f32.mrb[0].mxu0
    %v1147 = vadd.f32 %v1018, %v1146
    %v1148 = vpop.f32.mrb[0].mxu0
    %1149 = vmatprep.mubr.f32.mxu0 0.0
    %1150 = vmatmul.mubr.f32.gmra.mrb[0].mxu0 %v1050
    %v1151 = vpop.f32.mrb[0].mxu0
    %v1152 = vadd.f32 %v1023, %v1151
    %v1153 = vpop.f32.mrb[0].mxu0
    %1154 = vmatprep.mubr.f32.mxu0 0.0
    %1155 = vmatmul.mubr.f32.gmra.mrb[0].mxu0 %v1053
    %v1156 = vpop.f32.mrb[0].mxu0
    %v1157 = vadd.f32 %v1028, %v1156
    %v1158 = vpop.f32.mrb[0].mxu0
    %1159 = vdwg.mxu0
    %v1160 = vadd.f32 %v1122, %v634
    %v1161 = vadd.f32 %v1127, %v634
    %v1162 = vadd.f32 %v1132, %v634
    %v1163 = vadd.f32 %v1137, %v634
    %v1164 = vadd.f32 %v1142, %v634
    %v1165 = vadd.f32 %v1147, %v634
    %v1166 = vadd.f32 %v1152, %v634
    %v1167 = vadd.f32 %v1157, %v634
    %v1168 = vxor.u32 %v1160, 2147483648
    %v1169 = vxor.u32 %v1161, 2147483648
    %v1170 = vxor.u32 %v1162, 2147483648
    %v1171 = vxor.u32 %v1163, 2147483648
    %v1172 = vxor.u32 %v1164, 2147483648
    %v1173 = vxor.u32 %v1165, 2147483648
    %v1174 = vxor.u32 %v1166, 2147483648
    %v1175 = vxor.u32 %v1167, 2147483648
    %v1176 = vmul.f32 %v1168, 1.442695
    %v1177 = vpow.pop %v1176
    %v1178 = vmul.f32 %v1169, 1.442695
    %v1179 = vpow.pop %v1178
    %v1180 = vmul.f32 %v1170, 1.442695
    %v1181 = vpow.pop %v1180
    %v1182 = vmul.f32 %v1171, 1.442695
    %v1183 = vpow.pop %v1182
    %v1184 = vmul.f32 %v1172, 1.442695
    %v1185 = vpow.pop %v1184
    %v1186 = vmul.f32 %v1173, 1.442695
    %v1187 = vpow.pop %v1186
    %v1188 = vmul.f32 %v1174, 1.442695
    %v1189 = vpow.pop %v1188
    %v1190 = vmul.f32 %v1175, 1.442695
    %v1191 = vpow.pop %v1190
    %v1192 = vadd.f32 %v1177, 1.0
    %v1193 = vadd.f32 %v1179, 1.0
    %v1194 = vadd.f32 %v1181, 1.0
    %v1195 = vadd.f32 %v1183, 1.0
    %v1196 = vadd.f32 %v1185, 1.0
    %v1197 = vadd.f32 %v1187, 1.0
    %v1198 = vadd.f32 %v1189, 1.0
    %v1199 = vadd.f32 %v1191, 1.0
    %v1200 = vrcp.pop %v1192
    %v1201 = vmul.f32 1.0, %v1200
    %v1202 = vrcp.pop %v1193
    %v1203 = vmul.f32 1.0, %v1202
    %v1204 = vrcp.pop %v1194
    %v1205 = vmul.f32 1.0, %v1204
    %v1206 = vrcp.pop %v1195
    %v1207 = vmul.f32 1.0, %v1206
    %v1208 = vrcp.pop %v1196
    %v1209 = vmul.f32 1.0, %v1208
    %v1210 = vrcp.pop %v1197
    %v1211 = vmul.f32 1.0, %v1210
    %v1212 = vrcp.pop %v1198
    %v1213 = vmul.f32 1.0, %v1212
    %v1214 = vrcp.pop %v1199
    %v1215 = vmul.f32 1.0, %v1214
    %v1216 = vtanh.pop %v1160
    %v1217 = vtanh.pop %v1161
    %v1218 = vtanh.pop %v1162
    %v1219 = vtanh.pop %v1163
    %v1220 = vtanh.pop %v1164
    %v1221 = vtanh.pop %v1165
    %v1222 = vtanh.pop %v1166
    %v1223 = vtanh.pop %v1167
    %1232 = vrot.lane.b32.xlu0 %v829, 32
    %v1233 = vpop.permute.xlu0 %1232
    %1234 = vrot.lane.b32.xlu0 %v830, 32
    %v1235 = vpop.permute.xlu0 %1234
    %1236 = vrot.lane.b32.xlu0 %v831, 32
    %v1237 = vpop.permute.xlu0 %1236
    %1238 = vrot.lane.b32.xlu0 %v832, 32
    %v1239 = vpop.permute.xlu0 %1238
    %1240 = vrot.lane.b32.xlu0 %v833, 32
    %v1241 = vpop.permute.xlu0 %1240
    %1242 = vrot.lane.b32.xlu0 %v834, 32
    %v1243 = vpop.permute.xlu0 %1242
    %1244 = vrot.lane.b32.xlu0 %v835, 32
    %v1245 = vpop.permute.xlu0 %1244
    %1246 = vrot.lane.b32.xlu0 %v836, 32
    %v1247 = vpop.permute.xlu0 %1246
    %v1256 = vmul.f32 %v1201, %v1233
    %v1257 = vmul.f32 %v1203, %v1235
    %v1258 = vmul.f32 %v1205, %v1237
    %v1259 = vmul.f32 %v1207, %v1239
    %v1260 = vmul.f32 %v1209, %v1241
    %v1261 = vmul.f32 %v1211, %v1243
    %v1262 = vmul.f32 %v1213, %v1245
    %v1263 = vmul.f32 %v1215, %v1247
    %1272 = vrot.lane.b32.xlu0 %v1216, 32
    %v1273 = vpop.permute.xlu0 %1272
    %1274 = vrot.lane.b32.xlu0 %v1217, 32
    %v1275 = vpop.permute.xlu0 %1274
    %1276 = vrot.lane.b32.xlu0 %v1218, 32
    %v1277 = vpop.permute.xlu0 %1276
    %1278 = vrot.lane.b32.xlu0 %v1219, 32
    %v1279 = vpop.permute.xlu0 %1278
    %1280 = vrot.lane.b32.xlu0 %v1220, 32
    %v1281 = vpop.permute.xlu0 %1280
    %1282 = vrot.lane.b32.xlu0 %v1221, 32
    %v1283 = vpop.permute.xlu0 %1282
    %1284 = vrot.lane.b32.xlu0 %v1222, 32
    %v1285 = vpop.permute.xlu0 %1284
    %1286 = vrot.lane.b32.xlu0 %v1223, 32
    %v1287 = vpop.permute.xlu0 %1286
    %v1296 = vmul.f32 %v1201, %v1273
    %v1297 = vmul.f32 %v1203, %v1275
    %v1298 = vmul.f32 %v1205, %v1277
    %v1299 = vmul.f32 %v1207, %v1279
    %v1300 = vmul.f32 %v1209, %v1281
    %v1301 = vmul.f32 %v1211, %v1283
    %v1302 = vmul.f32 %v1213, %v1285
    %v1303 = vmul.f32 %v1215, %v1287
    %1312 = vrot.lane.b32.xlu0 %v1296, 32
    %v1313 = vpop.permute.xlu0 %1312
    %1314 = vrot.lane.b32.xlu0 %v1297, 32
    %v1315 = vpop.permute.xlu0 %1314
    %1316 = vrot.lane.b32.xlu0 %v1298, 32
    %v1317 = vpop.permute.xlu0 %1316
    %1318 = vrot.lane.b32.xlu0 %v1299, 32
    %v1319 = vpop.permute.xlu0 %1318
    %1320 = vrot.lane.b32.xlu0 %v1300, 32
    %v1321 = vpop.permute.xlu0 %1320
    %1322 = vrot.lane.b32.xlu0 %v1301, 32
    %v1323 = vpop.permute.xlu0 %1322
    %1324 = vrot.lane.b32.xlu0 %v1302, 32
    %v1325 = vpop.permute.xlu0 %1324
    %1326 = vrot.lane.b32.xlu0 %v1303, 32
    %v1327 = vpop.permute.xlu0 %1326
    %v1336 = vadd.f32 %v1256, %v1313
    %v1337 = vadd.f32 %v1257, %v1315
    %v1338 = vadd.f32 %v1258, %v1317
    %v1339 = vadd.f32 %v1259, %v1319
    %v1340 = vadd.f32 %v1260, %v1321
    %v1341 = vadd.f32 %v1261, %v1323
    %v1342 = vadd.f32 %v1262, %v1325
    %v1343 = vadd.f32 %v1263, %v1327
    %v1344 = vtanh.pop %v1336
    %v1345 = vtanh.pop %v1337
    %v1346 = vtanh.pop %v1338
    %v1347 = vtanh.pop %v1339
    %v1348 = vtanh.pop %v1340
    %v1349 = vtanh.pop %v1341
    %v1350 = vtanh.pop %v1342
    %v1351 = vtanh.pop %v1343
    %1360 = vrot.lane.b32.xlu0 %v1344, 32
    %v1361 = vpop.permute.xlu0 %1360
    %1362 = vrot.lane.b32.xlu0 %v1345, 32
    %v1363 = vpop.permute.xlu0 %1362
    %1364 = vrot.lane.b32.xlu0 %v1346, 32
    %v1365 = vpop.permute.xlu0 %1364
    %1366 = vrot.lane.b32.xlu0 %v1347, 32
    %v1367 = vpop.permute.xlu0 %1366
    %1368 = vrot.lane.b32.xlu0 %v1348, 32
    %v1369 = vpop.permute.xlu0 %1368
    %1370 = vrot.lane.b32.xlu0 %v1349, 32
    %v1371 = vpop.permute.xlu0 %1370
    %1372 = vrot.lane.b32.xlu0 %v1350, 32
    %v1373 = vpop.permute.xlu0 %1372
    %1374 = vrot.lane.b32.xlu0 %v1351, 32
    %v1375 = vpop.permute.xlu0 %1374
    %v1384 = vmul.f32 %v1201, %v1361
    %v1385 = vmul.f32 %v1203, %v1363
    %v1386 = vmul.f32 %v1205, %v1365
    %v1387 = vmul.f32 %v1207, %v1367
    %v1388 = vmul.f32 %v1209, %v1369
    %v1389 = vmul.f32 %v1211, %v1371
    %v1390 = vmul.f32 %v1213, %v1373
    %v1391 = vmul.f32 %v1215, %v1375
    %v1393 = vlaneseq
    %v1394 = vshrl.u32 %v1393, 7
    %v1395 = vsub.s32 0, %v1394
    %v1396 = vrot.slane %v629, %v1395
    %1398 = vmatprep.subr.mxu0 0.0
    %1399 = vmatpush1.msra.mxu0 %v623
    %1400 = vmatprep.subr.mxu0 0.0
    %1401 = vmatpush1.msra.mxu0 %v624
    %1402 = vmatprep.subr.mxu0 0.0
    %1403 = vmatpush1.msra.mxu0 0.0
    %1404 = vmatprep.subr.mxu0 0.0
    %1405 = vmatpush1.msra.mxu0 0.0
    %1406 = vmatprep.subr.mxu0 0.0
    %1407 = vmatpush1.msra.mxu0 0.0
    %1408 = vmatprep.subr.mxu0 0.0
    %1409 = vmatpush1.msra.mxu0 0.0
    %1410 = vmatprep.subr.mxu0 0.0
    %1411 = vmatpush1.msra.mxu0 0.0
    %1412 = vmatprep.subr.mxu0 0.0
    %1413 = vmatpush1.msra.mxu0 0.0
    %1414 = vmatprep.subr.mxu0 0.0
    %1415 = vmatpush1.msra.mxu0 0.0
    %1416 = vmatprep.subr.mxu0 0.0
    %1417 = vmatpush1.msra.mxu0 0.0
    %1418 = vmatprep.subr.mxu0 0.0
    %1419 = vmatpush1.msra.mxu0 0.0
    %1420 = vmatprep.subr.mxu0 0.0
    %1421 = vmatpush1.msra.mxu0 0.0
    %1422 = vmatprep.subr.mxu0 0.0
    %1423 = vmatpush1.msra.mxu0 0.0
    %1424 = vmatprep.subr.mxu0 0.0
    %1425 = vmatpush1.msra.mxu0 0.0
    %1426 = vmatprep.subr.mxu0 0.0
    %1427 = vmatpush1.msra.mxu0 0.0
    %1428 = vmatprep.subr.mxu0 0.0
    %1429 = vmatpush1.msra.mxu0 0.0
    %1430 = vmatprep.subr.mxu0 0.0
    %1431 = vmatpush1.msra.mxu0 0.0
    %1432 = vmatprep.subr.mxu0 0.0
    %1433 = vmatpush1.msra.mxu0 0.0
    %1434 = vmatprep.subr.mxu0 0.0
    %1435 = vmatpush1.msra.mxu0 0.0
    %1436 = vmatprep.subr.mxu0 0.0
    %1437 = vmatpush1.msra.mxu0 0.0
    %1438 = vmatprep.subr.mxu0 0.0
    %1439 = vmatpush1.msra.mxu0 0.0
    %1440 = vmatprep.subr.mxu0 0.0
    %1441 = vmatpush1.msra.mxu0 0.0
    %1442 = vmatprep.subr.mxu0 0.0
    %1443 = vmatpush1.msra.mxu0 0.0
    %1444 = vmatprep.subr.mxu0 0.0
    %1445 = vmatpush1.msra.mxu0 0.0
    %1446 = vmatprep.subr.mxu0 0.0
    %1447 = vmatpush1.msra.mxu0 0.0
    %1448 = vmatprep.subr.mxu0 0.0
    %1449 = vmatpush1.msra.mxu0 0.0
    %1450 = vmatprep.subr.mxu0 0.0
    %1451 = vmatpush1.msra.mxu0 0.0
    %1452 = vmatprep.subr.mxu0 0.0
    %1453 = vmatpush1.msra.mxu0 0.0
    %1454 = vmatprep.subr.mxu0 0.0
    %1455 = vmatpush1.msra.mxu0 0.0
    %1456 = vmatprep.subr.mxu0 0.0
    %1457 = vmatpush1.msra.mxu0 0.0
    %1458 = vmatprep.subr.mxu0 0.0
    %1459 = vmatpush1.msra.mxu0 0.0
    %1460 = vmatprep.subr.mxu0 0.0
    %1461 = vmatpush1.msra.mxu0 0.0
    %1462 = vmatprep.mubr.f32.mxu0 0.0
    %1463 = vmatmul.mubr.f32.gmra.mrb[0].mxu0 %v1032
    %v1464 = vpop.f32.mrb[0].mxu0
    %v1465 = vadd.f32 %v1396, %v1464
    %v1466 = vpop.f32.mrb[0].mxu0
    %1467 = vmatprep.mubr.f32.mxu0 0.0
    %1468 = vmatmul.mubr.f32.gmra.mrb[0].mxu0 %v1035
    %v1469 = vpop.f32.mrb[0].mxu0
    %v1470 = vadd.f32 %v1396, %v1469
    %v1471 = vpop.f32.mrb[0].mxu0
    %1472 = vmatprep.mubr.f32.mxu0 0.0
    %1473 = vmatmul.mubr.f32.gmra.mrb[0].mxu0 %v1038
    %v1474 = vpop.f32.mrb[0].mxu0
    %v1475 = vadd.f32 %v1396, %v1474
    %v1476 = vpop.f32.mrb[0].mxu0
    %1477 = vmatprep.mubr.f32.mxu0 0.0
    %1478 = vmatmul.mubr.f32.gmra.mrb[0].mxu0 %v1041
    %v1479 = vpop.f32.mrb[0].mxu0
    %v1480 = vadd.f32 %v1396, %v1479
    %v1481 = vpop.f32.mrb[0].mxu0
    %1482 = vmatprep.mubr.f32.mxu0 0.0
    %1483 = vmatmul.mubr.f32.gmra.mrb[0].mxu0 %v1044
    %v1484 = vpop.f32.mrb[0].mxu0
    %v1485 = vadd.f32 %v1396, %v1484
    %v1486 = vpop.f32.mrb[0].mxu0
    %1487 = vmatprep.mubr.f32.mxu0 0.0
    %1488 = vmatmul.mubr.f32.gmra.mrb[0].mxu0 %v1047
    %v1489 = vpop.f32.mrb[0].mxu0
    %v1490 = vadd.f32 %v1396, %v1489
    %v1491 = vpop.f32.mrb[0].mxu0
    %1492 = vmatprep.mubr.f32.mxu0 0.0
    %1493 = vmatmul.mubr.f32.gmra.mrb[0].mxu0 %v1050
    %v1494 = vpop.f32.mrb[0].mxu0
    %v1495 = vadd.f32 %v1396, %v1494
    %v1496 = vpop.f32.mrb[0].mxu0
    %1497 = vmatprep.mubr.f32.mxu0 0.0
    %1498 = vmatmul.mubr.f32.gmra.mrb[0].mxu0 %v1053
    %v1499 = vpop.f32.mrb[0].mxu0
    %v1500 = vadd.f32 %v1396, %v1499
    %v1501 = vpop.f32.mrb[0].mxu0
    %1502 = vdwg.mxu0
    %v1503 = vxor.u32 %v1465, 2147483648
    %v1504 = vxor.u32 %v1470, 2147483648
    %v1505 = vxor.u32 %v1475, 2147483648
    %v1506 = vxor.u32 %v1480, 2147483648
    %v1507 = vxor.u32 %v1485, 2147483648
    %v1508 = vxor.u32 %v1490, 2147483648
    %v1509 = vxor.u32 %v1495, 2147483648
    %v1510 = vxor.u32 %v1500, 2147483648
    %v1511 = vmul.f32 %v1503, 1.442695
    %v1512 = vpow.pop %v1511
    %v1513 = vmul.f32 %v1504, 1.442695
    %v1514 = vpow.pop %v1513
    %v1515 = vmul.f32 %v1505, 1.442695
    %v1516 = vpow.pop %v1515
    %v1517 = vmul.f32 %v1506, 1.442695
    %v1518 = vpow.pop %v1517
    %v1519 = vmul.f32 %v1507, 1.442695
    %v1520 = vpow.pop %v1519
    %v1521 = vmul.f32 %v1508, 1.442695
    %v1522 = vpow.pop %v1521
    %v1523 = vmul.f32 %v1509, 1.442695
    %v1524 = vpow.pop %v1523
    %v1525 = vmul.f32 %v1510, 1.442695
    %v1526 = vpow.pop %v1525
    %v1527 = vadd.f32 %v1512, 1.0
    %v1528 = vadd.f32 %v1514, 1.0
    %v1529 = vadd.f32 %v1516, 1.0
    %v1530 = vadd.f32 %v1518, 1.0
    %v1531 = vadd.f32 %v1520, 1.0
    %v1532 = vadd.f32 %v1522, 1.0
    %v1533 = vadd.f32 %v1524, 1.0
    %v1534 = vadd.f32 %v1526, 1.0
    %v1535 = vrcp.pop %v1527
    %v1536 = vmul.f32 1.0, %v1535
    %v1537 = vrcp.pop %v1528
    %v1538 = vmul.f32 1.0, %v1537
    %v1539 = vrcp.pop %v1529
    %v1540 = vmul.f32 1.0, %v1539
    %v1541 = vrcp.pop %v1530
    %v1542 = vmul.f32 1.0, %v1541
    %v1543 = vrcp.pop %v1531
    %v1544 = vmul.f32 1.0, %v1543
    %v1545 = vrcp.pop %v1532
    %v1546 = vmul.f32 1.0, %v1545
    %v1547 = vrcp.pop %v1533
    %v1548 = vmul.f32 1.0, %v1547
    %v1549 = vrcp.pop %v1534
    %v1550 = vmul.f32 1.0, %v1549
    %v1551 = vtanh.pop %v1465
    %v1552 = vtanh.pop %v1470
    %v1553 = vtanh.pop %v1475
    %v1554 = vtanh.pop %v1480
    %v1555 = vtanh.pop %v1485
    %v1556 = vtanh.pop %v1490
    %v1557 = vtanh.pop %v1495
    %v1558 = vtanh.pop %v1500
    %1567 = vrot.lane.b32.xlu0 %v1551, 32
    %v1568 = vpop.permute.xlu0 %1567
    %1569 = vrot.lane.b32.xlu0 %v1552, 32
    %v1570 = vpop.permute.xlu0 %1569
    %1571 = vrot.lane.b32.xlu0 %v1553, 32
    %v1572 = vpop.permute.xlu0 %1571
    %1573 = vrot.lane.b32.xlu0 %v1554, 32
    %v1574 = vpop.permute.xlu0 %1573
    %1575 = vrot.lane.b32.xlu0 %v1555, 32
    %v1576 = vpop.permute.xlu0 %1575
    %1577 = vrot.lane.b32.xlu0 %v1556, 32
    %v1578 = vpop.permute.xlu0 %1577
    %1579 = vrot.lane.b32.xlu0 %v1557, 32
    %v1580 = vpop.permute.xlu0 %1579
    %1581 = vrot.lane.b32.xlu0 %v1558, 32
    %v1582 = vpop.permute.xlu0 %1581
    %v1591 = vmul.f32 %v1536, %v1568
    %v1592 = vmul.f32 %v1538, %v1570
    %v1593 = vmul.f32 %v1540, %v1572
    %v1594 = vmul.f32 %v1542, %v1574
    %v1595 = vmul.f32 %v1544, %v1576
    %v1596 = vmul.f32 %v1546, %v1578
    %v1597 = vmul.f32 %v1548, %v1580
    %v1598 = vmul.f32 %v1550, %v1582
    %v1599 = vtanh.pop %v1591
    %v1600 = vtanh.pop %v1592
    %v1601 = vtanh.pop %v1593
    %v1602 = vtanh.pop %v1594
    %v1603 = vtanh.pop %v1595
    %v1604 = vtanh.pop %v1596
    %v1605 = vtanh.pop %v1597
    %v1606 = vtanh.pop %v1598
    %1615 = vrot.lane.b32.xlu0 %v1599, 64
    %v1616 = vpop.permute.xlu0 %1615
    %1617 = vrot.lane.b32.xlu0 %v1600, 64
    %v1618 = vpop.permute.xlu0 %1617
    %1619 = vrot.lane.b32.xlu0 %v1601, 64
    %v1620 = vpop.permute.xlu0 %1619
    %1621 = vrot.lane.b32.xlu0 %v1602, 64
    %v1622 = vpop.permute.xlu0 %1621
    %1623 = vrot.lane.b32.xlu0 %v1603, 64
    %v1624 = vpop.permute.xlu0 %1623
    %1625 = vrot.lane.b32.xlu0 %v1604, 64
    %v1626 = vpop.permute.xlu0 %1625
    %1627 = vrot.lane.b32.xlu0 %v1605, 64
    %v1628 = vpop.permute.xlu0 %1627
    %1629 = vrot.lane.b32.xlu0 %v1606, 64
    %v1630 = vpop.permute.xlu0 %1629
    %v1639 = vmul.f32 %v1536, %v1616
    %v1640 = vmul.f32 %v1538, %v1618
    %v1641 = vmul.f32 %v1540, %v1620
    %v1642 = vmul.f32 %v1542, %v1622
    %v1643 = vmul.f32 %v1544, %v1624
    %v1644 = vmul.f32 %v1546, %v1626
    %v1645 = vmul.f32 %v1548, %v1628
    %v1646 = vmul.f32 %v1550, %v1630
    %1655 = vrot.lane.b32.xlu0 %v1639, 64
    %v1656 = vpop.permute.xlu0 %1655
    %1657 = vrot.lane.b32.xlu0 %v1640, 64
    %v1658 = vpop.permute.xlu0 %1657
    %1659 = vrot.lane.b32.xlu0 %v1641, 64
    %v1660 = vpop.permute.xlu0 %1659
    %1661 = vrot.lane.b32.xlu0 %v1642, 64
    %v1662 = vpop.permute.xlu0 %1661
    %1663 = vrot.lane.b32.xlu0 %v1643, 64
    %v1664 = vpop.permute.xlu0 %1663
    %1665 = vrot.lane.b32.xlu0 %v1644, 64
    %v1666 = vpop.permute.xlu0 %1665
    %1667 = vrot.lane.b32.xlu0 %v1645, 64
    %v1668 = vpop.permute.xlu0 %1667
    %1669 = vrot.lane.b32.xlu0 %v1646, 64
    %v1670 = vpop.permute.xlu0 %1669
    %v1671 = vsel %vm909, %v1656, 0
    %v1673 = vsel %vm909, %v1658, 0
    %v1675 = vsel %vm909, %v1660, 0
    %v1677 = vsel %vm909, %v1662, 0
    %v1679 = vsel %vm909, %v1664, 0
    %v1681 = vsel %vm909, %v1666, 0
    %v1683 = vsel %vm909, %v1668, 0
    %v1685 = vsel %vm909, %v1670, 0
    %1687 = vmatprep.subr.mxu0 0.0
    %1688 = vmatpush1.msra.mxu0 %v625
    %1689 = vmatprep.subr.mxu0 0.0
    %1690 = vmatpush1.msra.mxu0 %v626
    %1691 = vmatprep.subr.mxu0 0.0
    %1692 = vmatpush1.msra.mxu0 %v627
    %1693 = vmatprep.subr.mxu0 0.0
    %1694 = vmatpush1.msra.mxu0 %v628
    %1695 = vmatprep.subr.mxu0 0.0
    %1696 = vmatpush1.msra.mxu0 0.0
    %1697 = vmatprep.subr.mxu0 0.0
    %1698 = vmatpush1.msra.mxu0 0.0
    %1699 = vmatprep.subr.mxu0 0.0
    %1700 = vmatpush1.msra.mxu0 0.0
    %1701 = vmatprep.subr.mxu0 0.0
    %1702 = vmatpush1.msra.mxu0 0.0
    %1703 = vmatprep.subr.mxu0 0.0
    %1704 = vmatpush1.msra.mxu0 0.0
    %1705 = vmatprep.subr.mxu0 0.0
    %1706 = vmatpush1.msra.mxu0 0.0
    %1707 = vmatprep.subr.mxu0 0.0
    %1708 = vmatpush1.msra.mxu0 0.0
    %1709 = vmatprep.subr.mxu0 0.0
    %1710 = vmatpush1.msra.mxu0 0.0
    %1711 = vmatprep.subr.mxu0 0.0
    %1712 = vmatpush1.msra.mxu0 0.0
    %1713 = vmatprep.subr.mxu0 0.0
    %1714 = vmatpush1.msra.mxu0 0.0
    %1715 = vmatprep.subr.mxu0 0.0
    %1716 = vmatpush1.msra.mxu0 0.0
    %1717 = vmatprep.subr.mxu0 0.0
    %1718 = vmatpush1.msra.mxu0 0.0
    %1719 = vmatprep.subr.mxu0 0.0
    %1720 = vmatpush1.msra.mxu0 0.0
    %1721 = vmatprep.subr.mxu0 0.0
    %1722 = vmatpush1.msra.mxu0 0.0
    %1723 = vmatprep.subr.mxu0 0.0
    %1724 = vmatpush1.msra.mxu0 0.0
    %1725 = vmatprep.subr.mxu0 0.0
    %1726 = vmatpush1.msra.mxu0 0.0
    %1727 = vmatprep.subr.mxu0 0.0
    %1728 = vmatpush1.msra.mxu0 0.0
    %1729 = vmatprep.subr.mxu0 0.0
    %1730 = vmatpush1.msra.mxu0 0.0
    %1731 = vmatprep.subr.mxu0 0.0
    %1732 = vmatpush1.msra.mxu0 0.0
    %1733 = vmatprep.subr.mxu0 0.0
    %1734 = vmatpush1.msra.mxu0 0.0
    %1735 = vmatprep.subr.mxu0 0.0
    %1736 = vmatpush1.msra.mxu0 0.0
    %1737 = vmatprep.subr.mxu0 0.0
    %1738 = vmatpush1.msra.mxu0 0.0
    %1739 = vmatprep.subr.mxu0 0.0
    %1740 = vmatpush1.msra.mxu0 0.0
    %1741 = vmatprep.subr.mxu0 0.0
    %1742 = vmatpush1.msra.mxu0 0.0
    %1743 = vmatprep.subr.mxu0 0.0
    %1744 = vmatpush1.msra.mxu0 0.0
    %1745 = vmatprep.subr.mxu0 0.0
    %1746 = vmatpush1.msra.mxu0 0.0
    %1747 = vmatprep.subr.mxu0 0.0
    %1748 = vmatpush1.msra.mxu0 0.0
    %1749 = vmatprep.subr.mxu0 0.0
    %1750 = vmatpush1.msra.mxu0 0.0
    %1751 = vmatprep.mubr.f32.mxu0 0.0
    %1752 = vmatmul.mubr.f32.gmra.mrb[0].mxu0 %v1671
    %v1753 = vpop.f32.mrb[0].mxu0
    %v1754 = vadd.f32 0.0, %v1753
    %v1755 = vpop.f32.mrb[0].mxu0
    %1756 = vmatprep.mubr.f32.mxu0 0.0
    %1757 = vmatmul.mubr.f32.gmra.mrb[0].mxu0 %v1673
    %v1758 = vpop.f32.mrb[0].mxu0
    %v1759 = vadd.f32 0.0, %v1758
    %v1760 = vpop.f32.mrb[0].mxu0
    %1761 = vmatprep.mubr.f32.mxu0 0.0
    %1762 = vmatmul.mubr.f32.gmra.mrb[0].mxu0 %v1675
    %v1763 = vpop.f32.mrb[0].mxu0
    %v1764 = vadd.f32 0.0, %v1763
    %v1765 = vpop.f32.mrb[0].mxu0
    %1766 = vmatprep.mubr.f32.mxu0 0.0
    %1767 = vmatmul.mubr.f32.gmra.mrb[0].mxu0 %v1677
    %v1768 = vpop.f32.mrb[0].mxu0
    %v1769 = vadd.f32 0.0, %v1768
    %v1770 = vpop.f32.mrb[0].mxu0
    %1771 = vmatprep.mubr.f32.mxu0 0.0
    %1772 = vmatmul.mubr.f32.gmra.mrb[0].mxu0 %v1679
    %v1773 = vpop.f32.mrb[0].mxu0
    %v1774 = vadd.f32 0.0, %v1773
    %v1775 = vpop.f32.mrb[0].mxu0
    %1776 = vmatprep.mubr.f32.mxu0 0.0
    %1777 = vmatmul.mubr.f32.gmra.mrb[0].mxu0 %v1681
    %v1778 = vpop.f32.mrb[0].mxu0
    %v1779 = vadd.f32 0.0, %v1778
    %v1780 = vpop.f32.mrb[0].mxu0
    %1781 = vmatprep.mubr.f32.mxu0 0.0
    %1782 = vmatmul.mubr.f32.gmra.mrb[0].mxu0 %v1683
    %v1783 = vpop.f32.mrb[0].mxu0
    %v1784 = vadd.f32 0.0, %v1783
    %v1785 = vpop.f32.mrb[0].mxu0
    %1786 = vmatprep.mubr.f32.mxu0 0.0
    %1787 = vmatmul.mubr.f32.gmra.mrb[0].mxu0 %v1685
    %v1788 = vpop.f32.mrb[0].mxu0
    %v1789 = vadd.f32 0.0, %v1788
    %v1790 = vpop.f32.mrb[0].mxu0
    %1791 = vdwg.mxu0
    %1792 = vmatprep.subr.mxu0 0.0
    %1793 = vmatpush1.msra.mxu0 %v623
    %1794 = vmatprep.subr.mxu0 0.0
    %1795 = vmatpush1.msra.mxu0 %v624
    %1796 = vmatprep.subr.mxu0 0.0
    %1797 = vmatpush1.msra.mxu0 0.0
    %1798 = vmatprep.subr.mxu0 0.0
    %1799 = vmatpush1.msra.mxu0 0.0
    %1800 = vmatprep.subr.mxu0 0.0
    %1801 = vmatpush1.msra.mxu0 0.0
    %1802 = vmatprep.subr.mxu0 0.0
    %1803 = vmatpush1.msra.mxu0 0.0
    %1804 = vmatprep.subr.mxu0 0.0
    %1805 = vmatpush1.msra.mxu0 0.0
    %1806 = vmatprep.subr.mxu0 0.0
    %1807 = vmatpush1.msra.mxu0 0.0
    %1808 = vmatprep.subr.mxu0 0.0
    %1809 = vmatpush1.msra.mxu0 0.0
    %1810 = vmatprep.subr.mxu0 0.0
    %1811 = vmatpush1.msra.mxu0 0.0
    %1812 = vmatprep.subr.mxu0 0.0
    %1813 = vmatpush1.msra.mxu0 0.0
    %1814 = vmatprep.subr.mxu0 0.0
    %1815 = vmatpush1.msra.mxu0 0.0
    %1816 = vmatprep.subr.mxu0 0.0
    %1817 = vmatpush1.msra.mxu0 0.0
    %1818 = vmatprep.subr.mxu0 0.0
    %1819 = vmatpush1.msra.mxu0 0.0
    %1820 = vmatprep.subr.mxu0 0.0
    %1821 = vmatpush1.msra.mxu0 0.0
    %1822 = vmatprep.subr.mxu0 0.0
    %1823 = vmatpush1.msra.mxu0 0.0
    %1824 = vmatprep.subr.mxu0 0.0
    %1825 = vmatpush1.msra.mxu0 0.0
    %1826 = vmatprep.subr.mxu0 0.0
    %1827 = vmatpush1.msra.mxu0 0.0
    %1828 = vmatprep.subr.mxu0 0.0
    %1829 = vmatpush1.msra.mxu0 0.0
    %1830 = vmatprep.subr.mxu0 0.0
    %1831 = vmatpush1.msra.mxu0 0.0
    %1832 = vmatprep.subr.mxu0 0.0
    %1833 = vmatpush1.msra.mxu0 0.0
    %1834 = vmatprep.subr.mxu0 0.0
    %1835 = vmatpush1.msra.mxu0 0.0
    %1836 = vmatprep.subr.mxu0 0.0
    %1837 = vmatpush1.msra.mxu0 0.0
    %1838 = vmatprep.subr.mxu0 0.0
    %1839 = vmatpush1.msra.mxu0 0.0
    %1840 = vmatprep.subr.mxu0 0.0
    %1841 = vmatpush1.msra.mxu0 0.0
    %1842 = vmatprep.subr.mxu0 0.0
    %1843 = vmatpush1.msra.mxu0 0.0
    %1844 = vmatprep.subr.mxu0 0.0
    %1845 = vmatpush1.msra.mxu0 0.0
    %1846 = vmatprep.subr.mxu0 0.0
    %1847 = vmatpush1.msra.mxu0 0.0
    %1848 = vmatprep.subr.mxu0 0.0
    %1849 = vmatpush1.msra.mxu0 0.0
    %1850 = vmatprep.subr.mxu0 0.0
    %1851 = vmatpush1.msra.mxu0 0.0
    %1852 = vmatprep.subr.mxu0 0.0
    %1853 = vmatpush1.msra.mxu0 0.0
    %1854 = vmatprep.subr.mxu0 0.0
    %1855 = vmatpush1.msra.mxu0 0.0
    %1856 = vmatprep.mubr.f32.mxu0 0.0
    %1857 = vmatmul.mubr.f32.gmra.mrb[0].mxu0 %v404
    %v1858 = vpop.f32.mrb[0].mxu0
    %v1859 = vadd.f32 %v1754, %v1858
    %v1860 = vpop.f32.mrb[0].mxu0
    %1861 = vmatprep.mubr.f32.mxu0 0.0
    %1862 = vmatmul.mubr.f32.gmra.mrb[0].mxu0 %v407
    %v1863 = vpop.f32.mrb[0].mxu0
    %v1864 = vadd.f32 %v1759, %v1863
    %v1865 = vpop.f32.mrb[0].mxu0
    %1866 = vmatprep.mubr.f32.mxu0 0.0
    %1867 = vmatmul.mubr.f32.gmra.mrb[0].mxu0 %v410
    %v1868 = vpop.f32.mrb[0].mxu0
    %v1869 = vadd.f32 %v1764, %v1868
    %v1870 = vpop.f32.mrb[0].mxu0
    %1871 = vmatprep.mubr.f32.mxu0 0.0
    %1872 = vmatmul.mubr.f32.gmra.mrb[0].mxu0 %v413
    %v1873 = vpop.f32.mrb[0].mxu0
    %v1874 = vadd.f32 %v1769, %v1873
    %v1875 = vpop.f32.mrb[0].mxu0
    %1876 = vmatprep.mubr.f32.mxu0 0.0
    %1877 = vmatmul.mubr.f32.gmra.mrb[0].mxu0 %v416
    %v1878 = vpop.f32.mrb[0].mxu0
    %v1879 = vadd.f32 %v1774, %v1878
    %v1880 = vpop.f32.mrb[0].mxu0
    %1881 = vmatprep.mubr.f32.mxu0 0.0
    %1882 = vmatmul.mubr.f32.gmra.mrb[0].mxu0 %v419
    %v1883 = vpop.f32.mrb[0].mxu0
    %v1884 = vadd.f32 %v1779, %v1883
    %v1885 = vpop.f32.mrb[0].mxu0
    %1886 = vmatprep.mubr.f32.mxu0 0.0
    %1887 = vmatmul.mubr.f32.gmra.mrb[0].mxu0 %v422
    %v1888 = vpop.f32.mrb[0].mxu0
    %v1889 = vadd.f32 %v1784, %v1888
    %v1890 = vpop.f32.mrb[0].mxu0
    %1891 = vmatprep.mubr.f32.mxu0 0.0
    %1892 = vmatmul.mubr.f32.gmra.mrb[0].mxu0 %v425
    %v1893 = vpop.f32.mrb[0].mxu0
    %v1894 = vadd.f32 %v1789, %v1893
    %v1895 = vpop.f32.mrb[0].mxu0
    %1896 = vdwg.mxu0
    %v1897 = vadd.f32 %v1859, %v1396
    %v1898 = vadd.f32 %v1864, %v1396
    %v1899 = vadd.f32 %v1869, %v1396
    %v1900 = vadd.f32 %v1874, %v1396
    %v1901 = vadd.f32 %v1879, %v1396
    %v1902 = vadd.f32 %v1884, %v1396
    %v1903 = vadd.f32 %v1889, %v1396
    %v1904 = vadd.f32 %v1894, %v1396
    %v1905 = vxor.u32 %v1897, 2147483648
    %v1906 = vxor.u32 %v1898, 2147483648
    %v1907 = vxor.u32 %v1899, 2147483648
    %v1908 = vxor.u32 %v1900, 2147483648
    %v1909 = vxor.u32 %v1901, 2147483648
    %v1910 = vxor.u32 %v1902, 2147483648
    %v1911 = vxor.u32 %v1903, 2147483648
    %v1912 = vxor.u32 %v1904, 2147483648
    %v1913 = vmul.f32 %v1905, 1.442695
    %v1914 = vpow.pop %v1913
    %v1915 = vmul.f32 %v1906, 1.442695
    %v1916 = vpow.pop %v1915
    %v1917 = vmul.f32 %v1907, 1.442695
    %v1918 = vpow.pop %v1917
    %v1919 = vmul.f32 %v1908, 1.442695
    %v1920 = vpow.pop %v1919
    %v1921 = vmul.f32 %v1909, 1.442695
    %v1922 = vpow.pop %v1921
    %v1923 = vmul.f32 %v1910, 1.442695
    %v1924 = vpow.pop %v1923
    %v1925 = vmul.f32 %v1911, 1.442695
    %v1926 = vpow.pop %v1925
    %v1927 = vmul.f32 %v1912, 1.442695
    %v1928 = vpow.pop %v1927
    %v1929 = vadd.f32 %v1914, 1.0
    %v1930 = vadd.f32 %v1916, 1.0
    %v1931 = vadd.f32 %v1918, 1.0
    %v1932 = vadd.f32 %v1920, 1.0
    %v1933 = vadd.f32 %v1922, 1.0
    %v1934 = vadd.f32 %v1924, 1.0
    %v1935 = vadd.f32 %v1926, 1.0
    %v1936 = vadd.f32 %v1928, 1.0
    %v1937 = vrcp.pop %v1929
    %v1938 = vmul.f32 1.0, %v1937
    %v1939 = vrcp.pop %v1930
    %v1940 = vmul.f32 1.0, %v1939
    %v1941 = vrcp.pop %v1931
    %v1942 = vmul.f32 1.0, %v1941
    %v1943 = vrcp.pop %v1932
    %v1944 = vmul.f32 1.0, %v1943
    %v1945 = vrcp.pop %v1933
    %v1946 = vmul.f32 1.0, %v1945
    %v1947 = vrcp.pop %v1934
    %v1948 = vmul.f32 1.0, %v1947
    %v1949 = vrcp.pop %v1935
    %v1950 = vmul.f32 1.0, %v1949
    %v1951 = vrcp.pop %v1936
    %v1952 = vmul.f32 1.0, %v1951
    %v1953 = vtanh.pop %v1897
    %v1954 = vtanh.pop %v1898
    %v1955 = vtanh.pop %v1899
    %v1956 = vtanh.pop %v1900
    %v1957 = vtanh.pop %v1901
    %v1958 = vtanh.pop %v1902
    %v1959 = vtanh.pop %v1903
    %v1960 = vtanh.pop %v1904
    %1969 = vrot.lane.b32.xlu0 %v1591, 32
    %v1970 = vpop.permute.xlu0 %1969
    %1971 = vrot.lane.b32.xlu0 %v1592, 32
    %v1972 = vpop.permute.xlu0 %1971
    %1973 = vrot.lane.b32.xlu0 %v1593, 32
    %v1974 = vpop.permute.xlu0 %1973
    %1975 = vrot.lane.b32.xlu0 %v1594, 32
    %v1976 = vpop.permute.xlu0 %1975
    %1977 = vrot.lane.b32.xlu0 %v1595, 32
    %v1978 = vpop.permute.xlu0 %1977
    %1979 = vrot.lane.b32.xlu0 %v1596, 32
    %v1980 = vpop.permute.xlu0 %1979
    %1981 = vrot.lane.b32.xlu0 %v1597, 32
    %v1982 = vpop.permute.xlu0 %1981
    %1983 = vrot.lane.b32.xlu0 %v1598, 32
    %v1984 = vpop.permute.xlu0 %1983
    %v1993 = vmul.f32 %v1938, %v1970
    %v1994 = vmul.f32 %v1940, %v1972
    %v1995 = vmul.f32 %v1942, %v1974
    %v1996 = vmul.f32 %v1944, %v1976
    %v1997 = vmul.f32 %v1946, %v1978
    %v1998 = vmul.f32 %v1948, %v1980
    %v1999 = vmul.f32 %v1950, %v1982
    %v2000 = vmul.f32 %v1952, %v1984
    %2009 = vrot.lane.b32.xlu0 %v1953, 32
    %v2010 = vpop.permute.xlu0 %2009
    %2011 = vrot.lane.b32.xlu0 %v1954, 32
    %v2012 = vpop.permute.xlu0 %2011
    %2013 = vrot.lane.b32.xlu0 %v1955, 32
    %v2014 = vpop.permute.xlu0 %2013
    %2015 = vrot.lane.b32.xlu0 %v1956, 32
    %v2016 = vpop.permute.xlu0 %2015
    %2017 = vrot.lane.b32.xlu0 %v1957, 32
    %v2018 = vpop.permute.xlu0 %2017
    %2019 = vrot.lane.b32.xlu0 %v1958, 32
    %v2020 = vpop.permute.xlu0 %2019
    %2021 = vrot.lane.b32.xlu0 %v1959, 32
    %v2022 = vpop.permute.xlu0 %2021
    %2023 = vrot.lane.b32.xlu0 %v1960, 32
    %v2024 = vpop.permute.xlu0 %2023
    %v2033 = vmul.f32 %v1938, %v2010
    %v2034 = vmul.f32 %v1940, %v2012
    %v2035 = vmul.f32 %v1942, %v2014
    %v2036 = vmul.f32 %v1944, %v2016
    %v2037 = vmul.f32 %v1946, %v2018
    %v2038 = vmul.f32 %v1948, %v2020
    %v2039 = vmul.f32 %v1950, %v2022
    %v2040 = vmul.f32 %v1952, %v2024
    %2049 = vrot.lane.b32.xlu0 %v2033, 32
    %v2050 = vpop.permute.xlu0 %2049
    %2051 = vrot.lane.b32.xlu0 %v2034, 32
    %v2052 = vpop.permute.xlu0 %2051
    %2053 = vrot.lane.b32.xlu0 %v2035, 32
    %v2054 = vpop.permute.xlu0 %2053
    %2055 = vrot.lane.b32.xlu0 %v2036, 32
    %v2056 = vpop.permute.xlu0 %2055
    %2057 = vrot.lane.b32.xlu0 %v2037, 32
    %v2058 = vpop.permute.xlu0 %2057
    %2059 = vrot.lane.b32.xlu0 %v2038, 32
    %v2060 = vpop.permute.xlu0 %2059
    %2061 = vrot.lane.b32.xlu0 %v2039, 32
    %v2062 = vpop.permute.xlu0 %2061
    %2063 = vrot.lane.b32.xlu0 %v2040, 32
    %v2064 = vpop.permute.xlu0 %2063
    %v2073 = vadd.f32 %v1993, %v2050
    %v2074 = vadd.f32 %v1994, %v2052
    %v2075 = vadd.f32 %v1995, %v2054
    %v2076 = vadd.f32 %v1996, %v2056
    %v2077 = vadd.f32 %v1997, %v2058
    %v2078 = vadd.f32 %v1998, %v2060
    %v2079 = vadd.f32 %v1999, %v2062
    %v2080 = vadd.f32 %v2000, %v2064
    %v2081 = vtanh.pop %v2073
    %v2082 = vtanh.pop %v2074
    %v2083 = vtanh.pop %v2075
    %v2084 = vtanh.pop %v2076
    %v2085 = vtanh.pop %v2077
    %v2086 = vtanh.pop %v2078
    %v2087 = vtanh.pop %v2079
    %v2088 = vtanh.pop %v2080
    %2097 = vrot.lane.b32.xlu0 %v2081, 32
    %v2098 = vpop.permute.xlu0 %2097
    %2099 = vrot.lane.b32.xlu0 %v2082, 32
    %v2100 = vpop.permute.xlu0 %2099
    %2101 = vrot.lane.b32.xlu0 %v2083, 32
    %v2102 = vpop.permute.xlu0 %2101
    %2103 = vrot.lane.b32.xlu0 %v2084, 32
    %v2104 = vpop.permute.xlu0 %2103
    %2105 = vrot.lane.b32.xlu0 %v2085, 32
    %v2106 = vpop.permute.xlu0 %2105
    %2107 = vrot.lane.b32.xlu0 %v2086, 32
    %v2108 = vpop.permute.xlu0 %2107
    %2109 = vrot.lane.b32.xlu0 %v2087, 32
    %v2110 = vpop.permute.xlu0 %2109
    %2111 = vrot.lane.b32.xlu0 %v2088, 32
    %v2112 = vpop.permute.xlu0 %2111
    %v2121 = vmul.f32 %v1938, %v2098
    %v2122 = vmul.f32 %v1940, %v2100
    %v2123 = vmul.f32 %v1942, %v2102
    %v2124 = vmul.f32 %v1944, %v2104
    %v2125 = vmul.f32 %v1946, %v2106
    %v2126 = vmul.f32 %v1948, %v2108
    %v2127 = vmul.f32 %v1950, %v2110
    %v2128 = vmul.f32 %v1952, %v2112
    %v2129 = vld [vmem:[%s12] sm:$0x1]
    %v2130 = vld [vmem:[%s13] sm:$0x1]
    %v2131 = vld [vmem:[#allocation2] sm:$0x1]
    %v2133 = vlaneseq
    %v2134 = vshrl.u32 %v2133, 7
    %v2135 = vsub.s32 0, %v2134
    %v2136 = vrot.slane %v2129, %v2135
    %2137 = vrot.lane.b32.xlu0 %v2136, 64
    %v2138 = vpop.permute.xlu0 %2137
    %v2140 = vmul.f32 %v877, %v2138
    %v2141 = vmul.f32 %v878, %v2138
    %v2142 = vmul.f32 %v879, %v2138
    %v2143 = vmul.f32 %v880, %v2138
    %v2144 = vmul.f32 %v881, %v2138
    %v2145 = vmul.f32 %v882, %v2138
    %v2146 = vmul.f32 %v883, %v2138
    %v2147 = vmul.f32 %v884, %v2138
    %v2149 = vlaneseq
    %v2150 = vshrl.u32 %v2149, 7
    %v2151 = vsub.s32 0, %v2150
    %v2152 = vrot.slane %v2130, %v2151
    %2153 = vrot.lane.b32.xlu0 %v2152, 64
    %v2154 = vpop.permute.xlu0 %2153
    %v2156 = vmul.f32 %v2121, %v2154
    %v2157 = vmul.f32 %v2122, %v2154
    %v2158 = vmul.f32 %v2123, %v2154
    %v2159 = vmul.f32 %v2124, %v2154
    %v2160 = vmul.f32 %v2125, %v2154
    %v2161 = vmul.f32 %v2126, %v2154
    %v2162 = vmul.f32 %v2127, %v2154
    %v2163 = vmul.f32 %v2128, %v2154
    %v2164 = vadd.f32 %v2140, %v2156
    %v2165 = vadd.f32 %v2141, %v2157
    %v2166 = vadd.f32 %v2142, %v2158
    %v2167 = vadd.f32 %v2143, %v2159
    %v2168 = vadd.f32 %v2144, %v2160
    %v2169 = vadd.f32 %v2145, %v2161
    %v2170 = vadd.f32 %v2146, %v2162
    %v2171 = vadd.f32 %v2147, %v2163
    %2180 = vrot.lane.b32.xlu0 %v2164, 64
    %v2181 = vpop.permute.xlu0 %2180
    %2182 = vrot.lane.b32.xlu0 %v2165, 64
    %v2183 = vpop.permute.xlu0 %2182
    %2184 = vrot.lane.b32.xlu0 %v2166, 64
    %v2185 = vpop.permute.xlu0 %2184
    %2186 = vrot.lane.b32.xlu0 %v2167, 64
    %v2187 = vpop.permute.xlu0 %2186
    %2188 = vrot.lane.b32.xlu0 %v2168, 64
    %v2189 = vpop.permute.xlu0 %2188
    %2190 = vrot.lane.b32.xlu0 %v2169, 64
    %v2191 = vpop.permute.xlu0 %2190
    %2192 = vrot.lane.b32.xlu0 %v2170, 64
    %v2193 = vpop.permute.xlu0 %2192
    %2194 = vrot.lane.b32.xlu0 %v2171, 64
    %v2195 = vpop.permute.xlu0 %2194
    %v2204 = vsel %vm909, %v2181, 0.0
    %2205 = vadd.xlane.f32.xlu0 %v2204
    %v2206 = vpop.xlane.xlu0 %2205
    %v2207 = vsel %vm909, %v2183, 0.0
    %2208 = vadd.xlane.f32.xlu0 %v2207
    %v2209 = vpop.xlane.xlu0 %2208
    %v2210 = vsel %vm909, %v2185, 0.0
    %2211 = vadd.xlane.f32.xlu0 %v2210
    %v2212 = vpop.xlane.xlu0 %2211
    %v2213 = vsel %vm909, %v2187, 0.0
    %2214 = vadd.xlane.f32.xlu0 %v2213
    %v2215 = vpop.xlane.xlu0 %2214
    %v2216 = vsel %vm909, %v2189, 0.0
    %2217 = vadd.xlane.f32.xlu0 %v2216
    %v2218 = vpop.xlane.xlu0 %2217
    %v2219 = vsel %vm909, %v2191, 0.0
    %2220 = vadd.xlane.f32.xlu0 %v2219
    %v2221 = vpop.xlane.xlu0 %2220
    %v2222 = vsel %vm909, %v2193, 0.0
    %2223 = vadd.xlane.f32.xlu0 %v2222
    %v2224 = vpop.xlane.xlu0 %2223
    %v2225 = vsel %vm909, %v2195, 0.0
    %2226 = vadd.xlane.f32.xlu0 %v2225
    %v2227 = vpop.xlane.xlu0 %2226
    %v2229 = vlaneseq
    %v2230 = vshrl.u32 %v2229, 7
    %v2231 = vsub.s32 0, %v2230
    %v2232 = vrot.slane %v2131, %v2231
    %v2234 = vadd.f32 %v2206, %v2232
    %v2235 = vadd.f32 %v2209, %v2232
    %v2236 = vadd.f32 %v2212, %v2232
    %v2237 = vadd.f32 %v2215, %v2232
    %v2238 = vadd.f32 %v2218, %v2232
    %v2239 = vadd.f32 %v2221, %v2232
    %v2240 = vadd.f32 %v2224, %v2232
    %v2241 = vadd.f32 %v2227, %v2232
    %v2242 = vmul.f32 %v1384, %v2138
    %v2243 = vmul.f32 %v1385, %v2138
    %v2244 = vmul.f32 %v1386, %v2138
    %v2245 = vmul.f32 %v1387, %v2138
    %v2246 = vmul.f32 %v1388, %v2138
    %v2247 = vmul.f32 %v1389, %v2138
    %v2248 = vmul.f32 %v1390, %v2138
    %v2249 = vmul.f32 %v1391, %v2138
    %v2250 = vmul.f32 %v1639, %v2154
    %v2251 = vmul.f32 %v1640, %v2154
    %v2252 = vmul.f32 %v1641, %v2154
    %v2253 = vmul.f32 %v1642, %v2154
    %v2254 = vmul.f32 %v1643, %v2154
    %v2255 = vmul.f32 %v1644, %v2154
    %v2256 = vmul.f32 %v1645, %v2154
    %v2257 = vmul.f32 %v1646, %v2154
    %v2258 = vadd.f32 %v2242, %v2250
    %v2259 = vadd.f32 %v2243, %v2251
    %v2260 = vadd.f32 %v2244, %v2252
    %v2261 = vadd.f32 %v2245, %v2253
    %v2262 = vadd.f32 %v2246, %v2254
    %v2263 = vadd.f32 %v2247, %v2255
    %v2264 = vadd.f32 %v2248, %v2256
    %v2265 = vadd.f32 %v2249, %v2257
    %2274 = vrot.lane.b32.xlu0 %v2258, 64
    %v2275 = vpop.permute.xlu0 %2274
    %2276 = vrot.lane.b32.xlu0 %v2259, 64
    %v2277 = vpop.permute.xlu0 %2276
    %2278 = vrot.lane.b32.xlu0 %v2260, 64
    %v2279 = vpop.permute.xlu0 %2278
    %2280 = vrot.lane.b32.xlu0 %v2261, 64
    %v2281 = vpop.permute.xlu0 %2280
    %2282 = vrot.lane.b32.xlu0 %v2262, 64
    %v2283 = vpop.permute.xlu0 %2282
    %2284 = vrot.lane.b32.xlu0 %v2263, 64
    %v2285 = vpop.permute.xlu0 %2284
    %2286 = vrot.lane.b32.xlu0 %v2264, 64
    %v2287 = vpop.permute.xlu0 %2286
    %2288 = vrot.lane.b32.xlu0 %v2265, 64
    %v2289 = vpop.permute.xlu0 %2288
    %v2298 = vsel %vm909, %v2275, 0.0
    %2299 = vadd.xlane.f32.xlu0 %v2298
    %v2300 = vpop.xlane.xlu0 %2299
    %v2301 = vsel %vm909, %v2277, 0.0
    %2302 = vadd.xlane.f32.xlu0 %v2301
    %v2303 = vpop.xlane.xlu0 %2302
    %v2304 = vsel %vm909, %v2279, 0.0
    %2305 = vadd.xlane.f32.xlu0 %v2304
    %v2306 = vpop.xlane.xlu0 %2305
    %v2307 = vsel %vm909, %v2281, 0.0
    %2308 = vadd.xlane.f32.xlu0 %v2307
    %v2309 = vpop.xlane.xlu0 %2308
    %v2310 = vsel %vm909, %v2283, 0.0
    %2311 = vadd.xlane.f32.xlu0 %v2310
    %v2312 = vpop.xlane.xlu0 %2311
    %v2313 = vsel %vm909, %v2285, 0.0
    %2314 = vadd.xlane.f32.xlu0 %v2313
    %v2315 = vpop.xlane.xlu0 %2314
    %v2316 = vsel %vm909, %v2287, 0.0
    %2317 = vadd.xlane.f32.xlu0 %v2316
    %v2318 = vpop.xlane.xlu0 %2317
    %v2319 = vsel %vm909, %v2289, 0.0
    %2320 = vadd.xlane.f32.xlu0 %v2319
    %v2321 = vpop.xlane.xlu0 %2320
    %v2322 = vadd.f32 %v2300, %v2232
    %v2323 = vadd.f32 %v2303, %v2232
    %v2324 = vadd.f32 %v2306, %v2232
    %v2325 = vadd.f32 %v2309, %v2232
    %v2326 = vadd.f32 %v2312, %v2232
    %v2327 = vadd.f32 %v2315, %v2232
    %v2328 = vadd.f32 %v2318, %v2232
    %v2329 = vadd.f32 %v2321, %v2232
    %v2330 = vmax.f32 %v2234, %v2322
    %v2331 = vmax.f32 %v2235, %v2323
    %v2332 = vmax.f32 %v2236, %v2324
    %v2333 = vmax.f32 %v2237, %v2325
    %v2334 = vmax.f32 %v2238, %v2326
    %v2335 = vmax.f32 %v2239, %v2327
    %v2336 = vmax.f32 %v2240, %v2328
    %v2337 = vmax.f32 %v2241, %v2329
    %v2338 = vsub.f32 %v2234, %v2330
    %v2339 = vsub.f32 %v2235, %v2331
    %v2340 = vsub.f32 %v2236, %v2332
    %v2341 = vsub.f32 %v2237, %v2333
    %v2342 = vsub.f32 %v2238, %v2334
    %v2343 = vsub.f32 %v2239, %v2335
    %v2344 = vsub.f32 %v2240, %v2336
    %v2345 = vsub.f32 %v2241, %v2337
    %v2346 = vmul.f32 %v2338, 1.442695
    %v2347 = vpow.pop %v2346
    %v2348 = vmul.f32 %v2339, 1.442695
    %v2349 = vpow.pop %v2348
    %v2350 = vmul.f32 %v2340, 1.442695
    %v2351 = vpow.pop %v2350
    %v2352 = vmul.f32 %v2341, 1.442695
    %v2353 = vpow.pop %v2352
    %v2354 = vmul.f32 %v2342, 1.442695
    %v2355 = vpow.pop %v2354
    %v2356 = vmul.f32 %v2343, 1.442695
    %v2357 = vpow.pop %v2356
    %v2358 = vmul.f32 %v2344, 1.442695
    %v2359 = vpow.pop %v2358
    %v2360 = vmul.f32 %v2345, 1.442695
    %v2361 = vpow.pop %v2360
    %v2362 = vsub.f32 %v2322, %v2330
    %v2363 = vsub.f32 %v2323, %v2331
    %v2364 = vsub.f32 %v2324, %v2332
    %v2365 = vsub.f32 %v2325, %v2333
    %v2366 = vsub.f32 %v2326, %v2334
    %v2367 = vsub.f32 %v2327, %v2335
    %v2368 = vsub.f32 %v2328, %v2336
    %v2369 = vsub.f32 %v2329, %v2337
    %v2370 = vmul.f32 %v2362, 1.442695
    %v2371 = vpow.pop %v2370
    %v2372 = vmul.f32 %v2363, 1.442695
    %v2373 = vpow.pop %v2372
    %v2374 = vmul.f32 %v2364, 1.442695
    %v2375 = vpow.pop %v2374
    %v2376 = vmul.f32 %v2365, 1.442695
    %v2377 = vpow.pop %v2376
    %v2378 = vmul.f32 %v2366, 1.442695
    %v2379 = vpow.pop %v2378
    %v2380 = vmul.f32 %v2367, 1.442695
    %v2381 = vpow.pop %v2380
    %v2382 = vmul.f32 %v2368, 1.442695
    %v2383 = vpow.pop %v2382
    %v2384 = vmul.f32 %v2369, 1.442695
    %v2385 = vpow.pop %v2384
    %v2386 = vadd.f32 %v2347, %v2371
    %v2387 = vadd.f32 %v2349, %v2373
    %v2388 = vadd.f32 %v2351, %v2375
    %v2389 = vadd.f32 %v2353, %v2377
    %v2390 = vadd.f32 %v2355, %v2379
    %v2391 = vadd.f32 %v2357, %v2381
    %v2392 = vadd.f32 %v2359, %v2383
    %v2393 = vadd.f32 %v2361, %v2385
    %v2394 = vrcp.pop %v2386
    %v2395 = vrcp.pop %v2387
    %v2396 = vrcp.pop %v2388
    %v2397 = vrcp.pop %v2389
    %v2398 = vrcp.pop %v2390
    %v2399 = vrcp.pop %v2391
    %v2400 = vrcp.pop %v2392
    %v2401 = vrcp.pop %v2393
    %v2402 = vmul.f32 %v2347, %v2394
    %v2403 = vmul.f32 %v2349, %v2395
    %v2404 = vmul.f32 %v2351, %v2396
    %v2405 = vmul.f32 %v2353, %v2397
    %v2406 = vmul.f32 %v2355, %v2398
    %v2407 = vmul.f32 %v2357, %v2399
    %v2408 = vmul.f32 %v2359, %v2400
    %v2409 = vmul.f32 %v2361, %v2401
    %2411 = vset.pattern.permute.xlu0 0
    %2412 = vperm.xlu0 %2411, %v2402
    %v2413 = vpop.permute.xlu0 %2412
    %2416 = vset.pattern.permute.xlu0 0
    %2417 = vperm.xlu0 %2416, %v2403
    %v2418 = vpop.permute.xlu0 %2417
    %2421 = vset.pattern.permute.xlu0 0
    %2422 = vperm.xlu0 %2421, %v2404
    %v2423 = vpop.permute.xlu0 %2422
    %2426 = vset.pattern.permute.xlu0 0
    %2427 = vperm.xlu0 %2426, %v2405
    %v2428 = vpop.permute.xlu0 %2427
    %2431 = vset.pattern.permute.xlu0 0
    %2432 = vperm.xlu0 %2431, %v2406
    %v2433 = vpop.permute.xlu0 %2432
    %2436 = vset.pattern.permute.xlu0 0
    %2437 = vperm.xlu0 %2436, %v2407
    %v2438 = vpop.permute.xlu0 %2437
    %2441 = vset.pattern.permute.xlu0 0
    %2442 = vperm.xlu0 %2441, %v2408
    %v2443 = vpop.permute.xlu0 %2442
    %2446 = vset.pattern.permute.xlu0 0
    %2447 = vperm.xlu0 %2446, %v2409
    %v2448 = vpop.permute.xlu0 %2447
    %v2450 = vmul.f32 %v392, %v2413
    %v2451 = vmul.f32 %v393, %v2418
    %v2452 = vmul.f32 %v394, %v2423
    %v2453 = vmul.f32 %v395, %v2428
    %v2454 = vmul.f32 %v396, %v2433
    %v2455 = vmul.f32 %v397, %v2438
    %v2456 = vmul.f32 %v398, %v2443
    %v2457 = vmul.f32 %v399, %v2448
    %v2458 = vmul.f32 %v2371, %v2394
    %v2459 = vmul.f32 %v2373, %v2395
    %v2460 = vmul.f32 %v2375, %v2396
    %v2461 = vmul.f32 %v2377, %v2397
    %v2462 = vmul.f32 %v2379, %v2398
    %v2463 = vmul.f32 %v2381, %v2399
    %v2464 = vmul.f32 %v2383, %v2400
    %v2465 = vmul.f32 %v2385, %v2401
    %2467 = vset.pattern.permute.xlu0 0
    %2468 = vperm.xlu0 %2467, %v2458
    %v2469 = vpop.permute.xlu0 %2468
    %2472 = vset.pattern.permute.xlu0 0
    %2473 = vperm.xlu0 %2472, %v2459
    %v2474 = vpop.permute.xlu0 %2473
    %2477 = vset.pattern.permute.xlu0 0
    %2478 = vperm.xlu0 %2477, %v2460
    %v2479 = vpop.permute.xlu0 %2478
    %2482 = vset.pattern.permute.xlu0 0
    %2483 = vperm.xlu0 %2482, %v2461
    %v2484 = vpop.permute.xlu0 %2483
    %2487 = vset.pattern.permute.xlu0 0
    %2488 = vperm.xlu0 %2487, %v2462
    %v2489 = vpop.permute.xlu0 %2488
    %2492 = vset.pattern.permute.xlu0 0
    %2493 = vperm.xlu0 %2492, %v2463
    %v2494 = vpop.permute.xlu0 %2493
    %2497 = vset.pattern.permute.xlu0 0
    %2498 = vperm.xlu0 %2497, %v2464
    %v2499 = vpop.permute.xlu0 %2498
    %2502 = vset.pattern.permute.xlu0 0
    %2503 = vperm.xlu0 %2502, %v2465
    %v2504 = vpop.permute.xlu0 %2503
    %v2506 = vmul.f32 %v608, %v2469
    %v2507 = vmul.f32 %v609, %v2474
    %v2508 = vmul.f32 %v610, %v2479
    %v2509 = vmul.f32 %v611, %v2484
    %v2510 = vmul.f32 %v612, %v2489
    %v2511 = vmul.f32 %v613, %v2494
    %v2512 = vmul.f32 %v614, %v2499
    %v2513 = vmul.f32 %v615, %v2504
    %v2514 = vadd.f32 %v2450, %v2506
    %v2515 = vadd.f32 %v2451, %v2507
    %v2516 = vadd.f32 %v2452, %v2508
    %v2517 = vadd.f32 %v2453, %v2509
    %v2518 = vadd.f32 %v2454, %v2510
    %v2519 = vadd.f32 %v2455, %v2511
    %v2520 = vadd.f32 %v2456, %v2512
    %v2521 = vadd.f32 %v2457, %v2513
    %v2522 = vpack.c.bf16 %v2515, %v2514
    %v2523 = vpack.c.bf16 %v2517, %v2516
    %v2524 = vpack.c.bf16 %v2519, %v2518
    %v2525 = vpack.c.bf16 %v2521, %v2520
    %2526 = vmatprep.subr.bf16.mxu0 0
    %2527 = vmatpush1.bf16.msra.mxu0 %v2522
    %2528 = vmatprep.subr.bf16.mxu0 0
    %2529 = vmatpush1.bf16.msra.mxu0 %v2523
    %2530 = vmatprep.subr.bf16.mxu0 0
    %2531 = vmatpush1.bf16.msra.mxu0 %v2524
    %2532 = vmatprep.subr.bf16.mxu0 0
    %2533 = vmatpush1.bf16.msra.mxu0 %v2525
    %2534 = vmatprep.subr.bf16.mxu0 0
    %2535 = vmatpush1.bf16.msra.mxu0 0
    %2536 = vmatprep.subr.bf16.mxu0 0
    %2537 = vmatpush1.bf16.msra.mxu0 0
    %2538 = vmatprep.subr.bf16.mxu0 0
    %2539 = vmatpush1.bf16.msra.mxu0 0
    %2540 = vmatprep.subr.bf16.mxu0 0
    %2541 = vmatpush1.bf16.msra.mxu0 0
    %2542 = vmatprep.subr.bf16.mxu0 0
    %2543 = vmatpush1.bf16.msra.mxu0 0
    %2544 = vmatprep.subr.bf16.mxu0 0
    %2545 = vmatpush1.bf16.msra.mxu0 0
    %2546 = vmatprep.subr.bf16.mxu0 0
    %2547 = vmatpush1.bf16.msra.mxu0 0
    %2548 = vmatprep.subr.bf16.mxu0 0
    %2549 = vmatpush1.bf16.msra.mxu0 0
    %2550 = vmatprep.subr.bf16.mxu0 0
    %2551 = vmatpush1.bf16.msra.mxu0 0
    %2552 = vmatprep.subr.bf16.mxu0 0
    %2553 = vmatpush1.bf16.msra.mxu0 0
    %2554 = vmatprep.subr.bf16.mxu0 0
    %2555 = vmatpush1.bf16.msra.mxu0 0
    %2556 = vmatprep.subr.bf16.mxu0 0
    %2557 = vmatpush1.bf16.msra.mxu0 0
    %2558 = vmatprep.mubr.bf16.mxu0 0
    %2559 = vmatmul.mubr.bf16.gmra.mrb[0].mxu0 %v178
    %v2560 = vpop.f32.mrb[0].mxu0
    %v2561 = vadd.f32 0.0, %v2560
    %v2562 = vpop.f32.mrb[0].mxu0
    %v2563 = vpop.f32.mrb[0].mxu0
    %v2564 = vadd.f32 0.0, %v2563
    %v2565 = vpop.f32.mrb[0].mxu0
    %2566 = vmatprep.mubr.bf16.mxu0 0
    %2567 = vmatmul.mubr.bf16.gmra.mrb[0].mxu0 %v181
    %v2568 = vpop.f32.mrb[0].mxu0
    %v2569 = vadd.f32 0.0, %v2568
    %v2570 = vpop.f32.mrb[0].mxu0
    %v2571 = vpop.f32.mrb[0].mxu0
    %v2572 = vadd.f32 0.0, %v2571
    %v2573 = vpop.f32.mrb[0].mxu0
    %2574 = vmatprep.mubr.bf16.mxu0 0
    %2575 = vmatmul.mubr.bf16.gmra.mrb[0].mxu0 %v184
    %v2576 = vpop.f32.mrb[0].mxu0
    %v2577 = vadd.f32 0.0, %v2576
    %v2578 = vpop.f32.mrb[0].mxu0
    %v2579 = vpop.f32.mrb[0].mxu0
    %v2580 = vadd.f32 0.0, %v2579
    %v2581 = vpop.f32.mrb[0].mxu0
    %2582 = vmatprep.mubr.bf16.mxu0 0
    %2583 = vmatmul.mubr.bf16.gmra.mrb[0].mxu0 %v187
    %v2584 = vpop.f32.mrb[0].mxu0
    %v2585 = vadd.f32 0.0, %v2584
    %v2586 = vpop.f32.mrb[0].mxu0
    %v2587 = vpop.f32.mrb[0].mxu0
    %v2588 = vadd.f32 0.0, %v2587
    %v2589 = vpop.f32.mrb[0].mxu0
    %2590 = vdwg.mxu0
    %v2591 = vld [vmem:[%s15] sm:$0xff]
    %v2592 = vld [vmem:[%s15 + $0x8] sm:$0xff]
    %v2593 = vld [vmem:[%s16] sm:$0x1]
    %v2595 = vlaneseq
    %v2596 = vshrl.u32 %v2595, 7
    %v2597 = vsub.s32 0, %v2596
    %v2598 = vrot.slane %v2593, %v2597
    %v2601 = vsel %vm402, %v2561, 0
    %v2604 = vsel %vm402, %v2564, 0
    %v2607 = vsel %vm402, %v2569, 0
    %v2610 = vsel %vm402, %v2572, 0
    %v2613 = vsel %vm402, %v2577, 0
    %v2616 = vsel %vm402, %v2580, 0
    %v2619 = vsel %vm402, %v2585, 0
    %v2622 = vsel %vm402, %v2588, 0
    %2624 = vmatprep.subr.mxu0 0.0
    %2625 = vmatpush1.msra.mxu0 %v2591
    %2626 = vmatprep.subr.mxu0 0.0
    %2627 = vmatpush1.msra.mxu0 %v2592
    %2628 = vmatprep.subr.mxu0 0.0
    %2629 = vmatpush1.msra.mxu0 0.0
    %2630 = vmatprep.subr.mxu0 0.0
    %2631 = vmatpush1.msra.mxu0 0.0
    %2632 = vmatprep.subr.mxu0 0.0
    %2633 = vmatpush1.msra.mxu0 0.0
    %2634 = vmatprep.subr.mxu0 0.0
    %2635 = vmatpush1.msra.mxu0 0.0
    %2636 = vmatprep.subr.mxu0 0.0
    %2637 = vmatpush1.msra.mxu0 0.0
    %2638 = vmatprep.subr.mxu0 0.0
    %2639 = vmatpush1.msra.mxu0 0.0
    %2640 = vmatprep.subr.mxu0 0.0
    %2641 = vmatpush1.msra.mxu0 0.0
    %2642 = vmatprep.subr.mxu0 0.0
    %2643 = vmatpush1.msra.mxu0 0.0
    %2644 = vmatprep.subr.mxu0 0.0
    %2645 = vmatpush1.msra.mxu0 0.0
    %2646 = vmatprep.subr.mxu0 0.0
    %2647 = vmatpush1.msra.mxu0 0.0
    %2648 = vmatprep.subr.mxu0 0.0
    %2649 = vmatpush1.msra.mxu0 0.0
    %2650 = vmatprep.subr.mxu0 0.0
    %2651 = vmatpush1.msra.mxu0 0.0
    %2652 = vmatprep.subr.mxu0 0.0
    %2653 = vmatpush1.msra.mxu0 0.0
    %2654 = vmatprep.subr.mxu0 0.0
    %2655 = vmatpush1.msra.mxu0 0.0
    %2656 = vmatprep.subr.mxu0 0.0
    %2657 = vmatpush1.msra.mxu0 0.0
    %2658 = vmatprep.subr.mxu0 0.0
    %2659 = vmatpush1.msra.mxu0 0.0
    %2660 = vmatprep.subr.mxu0 0.0
    %2661 = vmatpush1.msra.mxu0 0.0
    %2662 = vmatprep.subr.mxu0 0.0
    %2663 = vmatpush1.msra.mxu0 0.0
    %2664 = vmatprep.subr.mxu0 0.0
    %2665 = vmatpush1.msra.mxu0 0.0
    %2666 = vmatprep.subr.mxu0 0.0
    %2667 = vmatpush1.msra.mxu0 0.0
    %2668 = vmatprep.subr.mxu0 0.0
    %2669 = vmatpush1.msra.mxu0 0.0
    %2670 = vmatprep.subr.mxu0 0.0
    %2671 = vmatpush1.msra.mxu0 0.0
    %2672 = vmatprep.subr.mxu0 0.0
    %2673 = vmatpush1.msra.mxu0 0.0
    %2674 = vmatprep.subr.mxu0 0.0
    %2675 = vmatpush1.msra.mxu0 0.0
    %2676 = vmatprep.subr.mxu0 0.0
    %2677 = vmatpush1.msra.mxu0 0.0
    %2678 = vmatprep.subr.mxu0 0.0
    %2679 = vmatpush1.msra.mxu0 0.0
    %2680 = vmatprep.subr.mxu0 0.0
    %2681 = vmatpush1.msra.mxu0 0.0
    %2682 = vmatprep.subr.mxu0 0.0
    %2683 = vmatpush1.msra.mxu0 0.0
    %2684 = vmatprep.subr.mxu0 0.0
    %2685 = vmatpush1.msra.mxu0 0.0
    %2686 = vmatprep.subr.mxu0 0.0
    %2687 = vmatpush1.msra.mxu0 0.0
    %2688 = vmatprep.mubr.f32.mxu0 0.0
    %2689 = vmatmul.mubr.f32.gmra.mrb[0].mxu0 %v2601
    %v2690 = vpop.f32.mrb[0].mxu0
    %v2691 = vadd.f32 %v2598, %v2690
    %v2692 = vpop.f32.mrb[0].mxu0
    %2693 = vmatprep.mubr.f32.mxu0 0.0
    %2694 = vmatmul.mubr.f32.gmra.mrb[0].mxu0 %v2604
    %v2695 = vpop.f32.mrb[0].mxu0
    %v2696 = vadd.f32 %v2598, %v2695
    %v2697 = vpop.f32.mrb[0].mxu0
    %2698 = vmatprep.mubr.f32.mxu0 0.0
    %2699 = vmatmul.mubr.f32.gmra.mrb[0].mxu0 %v2607
    %v2700 = vpop.f32.mrb[0].mxu0
    %v2701 = vadd.f32 %v2598, %v2700
    %v2702 = vpop.f32.mrb[0].mxu0
    %2703 = vmatprep.mubr.f32.mxu0 0.0
    %2704 = vmatmul.mubr.f32.gmra.mrb[0].mxu0 %v2610
    %v2705 = vpop.f32.mrb[0].mxu0
    %v2706 = vadd.f32 %v2598, %v2705
    %v2707 = vpop.f32.mrb[0].mxu0
    %2708 = vmatprep.mubr.f32.mxu0 0.0
    %2709 = vmatmul.mubr.f32.gmra.mrb[0].mxu0 %v2613
    %v2710 = vpop.f32.mrb[0].mxu0
    %v2711 = vadd.f32 %v2598, %v2710
    %v2712 = vpop.f32.mrb[0].mxu0
    %2713 = vmatprep.mubr.f32.mxu0 0.0
    %2714 = vmatmul.mubr.f32.gmra.mrb[0].mxu0 %v2616
    %v2715 = vpop.f32.mrb[0].mxu0
    %v2716 = vadd.f32 %v2598, %v2715
    %v2717 = vpop.f32.mrb[0].mxu0
    %2718 = vmatprep.mubr.f32.mxu0 0.0
    %2719 = vmatmul.mubr.f32.gmra.mrb[0].mxu0 %v2619
    %v2720 = vpop.f32.mrb[0].mxu0
    %v2721 = vadd.f32 %v2598, %v2720
    %v2722 = vpop.f32.mrb[0].mxu0
    %2723 = vmatprep.mubr.f32.mxu0 0.0
    %2724 = vmatmul.mubr.f32.gmra.mrb[0].mxu0 %v2622
    %v2725 = vpop.f32.mrb[0].mxu0
    %v2726 = vadd.f32 %v2598, %v2725
    %v2727 = vpop.f32.mrb[0].mxu0
    %2728 = vdwg.mxu0
    %v2729 = vlaneseq
    %v2730 = vand.u32 %v2729, 127
    %vm2731 = vcmp.lt.s32.totalorder %v2730, 4
    %v2732 = vsel %vm2731, %v2691, -1e+30
    %v2733 = vsel %vm2731, %v2696, -1e+30
    %v2734 = vsel %vm2731, %v2701, -1e+30
    %v2735 = vsel %vm2731, %v2706, -1e+30
    %v2736 = vsel %vm2731, %v2711, -1e+30
    %v2737 = vsel %vm2731, %v2716, -1e+30
    %v2738 = vsel %vm2731, %v2721, -1e+30
    %v2739 = vsel %vm2731, %v2726, -1e+30
    %2740 = vmax.xlane.f32.xlu0 %v2732
    %v2741 = vpop.xlane.xlu0 %2740
    %2742 = vmax.xlane.f32.xlu0 %v2733
    %v2743 = vpop.xlane.xlu0 %2742
    %2744 = vmax.xlane.f32.xlu0 %v2734
    %v2745 = vpop.xlane.xlu0 %2744
    %2746 = vmax.xlane.f32.xlu0 %v2735
    %v2747 = vpop.xlane.xlu0 %2746
    %2748 = vmax.xlane.f32.xlu0 %v2736
    %v2749 = vpop.xlane.xlu0 %2748
    %2750 = vmax.xlane.f32.xlu0 %v2737
    %v2751 = vpop.xlane.xlu0 %2750
    %2752 = vmax.xlane.f32.xlu0 %v2738
    %v2753 = vpop.xlane.xlu0 %2752
    %2754 = vmax.xlane.f32.xlu0 %v2739
    %v2755 = vpop.xlane.xlu0 %2754
    %v2756 = vsub.f32 %v2691, %v2741
    %v2757 = vsub.f32 %v2696, %v2743
    %v2758 = vsub.f32 %v2701, %v2745
    %v2759 = vsub.f32 %v2706, %v2747
    %v2760 = vsub.f32 %v2711, %v2749
    %v2761 = vsub.f32 %v2716, %v2751
    %v2762 = vsub.f32 %v2721, %v2753
    %v2763 = vsub.f32 %v2726, %v2755
    %v2764 = vmul.f32 %v2756, 1.442695
    %v2765 = vpow.pop %v2764
    %v2766 = vmul.f32 %v2757, 1.442695
    %v2767 = vpow.pop %v2766
    %v2768 = vmul.f32 %v2758, 1.442695
    %v2769 = vpow.pop %v2768
    %v2770 = vmul.f32 %v2759, 1.442695
    %v2771 = vpow.pop %v2770
    %v2772 = vmul.f32 %v2760, 1.442695
    %v2773 = vpow.pop %v2772
    %v2774 = vmul.f32 %v2761, 1.442695
    %v2775 = vpow.pop %v2774
    %v2776 = vmul.f32 %v2762, 1.442695
    %v2777 = vpow.pop %v2776
    %v2778 = vmul.f32 %v2763, 1.442695
    %v2779 = vpow.pop %v2778
    %v2780 = vsel %vm2731, %v2765, 0.0
    %v2781 = vsel %vm2731, %v2767, 0.0
    %v2782 = vsel %vm2731, %v2769, 0.0
    %v2783 = vsel %vm2731, %v2771, 0.0
    %v2784 = vsel %vm2731, %v2773, 0.0
    %v2785 = vsel %vm2731, %v2775, 0.0
    %v2786 = vsel %vm2731, %v2777, 0.0
    %v2787 = vsel %vm2731, %v2779, 0.0
    %2788 = vadd.xlane.f32.xlu0 %v2780
    %v2789 = vpop.xlane.xlu0 %2788
    %2790 = vadd.xlane.f32.xlu0 %v2781
    %v2791 = vpop.xlane.xlu0 %2790
    %2792 = vadd.xlane.f32.xlu0 %v2782
    %v2793 = vpop.xlane.xlu0 %2792
    %2794 = vadd.xlane.f32.xlu0 %v2783
    %v2795 = vpop.xlane.xlu0 %2794
    %2796 = vadd.xlane.f32.xlu0 %v2784
    %v2797 = vpop.xlane.xlu0 %2796
    %2798 = vadd.xlane.f32.xlu0 %v2785
    %v2799 = vpop.xlane.xlu0 %2798
    %2800 = vadd.xlane.f32.xlu0 %v2786
    %v2801 = vpop.xlane.xlu0 %2800
    %2802 = vadd.xlane.f32.xlu0 %v2787
    %v2803 = vpop.xlane.xlu0 %2802
    %v2804 = vlog2.pop %v2789
    %v2805 = vmul.f32 %v2804, 0.6931472
    %v2806 = vlog2.pop %v2791
    %v2807 = vmul.f32 %v2806, 0.6931472
    %v2808 = vlog2.pop %v2793
    %v2809 = vmul.f32 %v2808, 0.6931472
    %v2810 = vlog2.pop %v2795
    %v2811 = vmul.f32 %v2810, 0.6931472
    %v2812 = vlog2.pop %v2797
    %v2813 = vmul.f32 %v2812, 0.6931472
    %v2814 = vlog2.pop %v2799
    %v2815 = vmul.f32 %v2814, 0.6931472
    %v2816 = vlog2.pop %v2801
    %v2817 = vmul.f32 %v2816, 0.6931472
    %v2818 = vlog2.pop %v2803
    %v2819 = vmul.f32 %v2818, 0.6931472
    %v2820 = vsub.f32 %v2756, %v2805
    %v2821 = vsub.f32 %v2757, %v2807
    %v2822 = vsub.f32 %v2758, %v2809
    %v2823 = vsub.f32 %v2759, %v2811
    %v2824 = vsub.f32 %v2760, %v2813
    %v2825 = vsub.f32 %v2761, %v2815
    %v2826 = vsub.f32 %v2762, %v2817
    %v2827 = vsub.f32 %v2763, %v2819
    %2828 = vst [vmem:[#allocation14] sm:$0xff] %v2820
    %2829 = vst [vmem:[#allocation14 + $0x8] sm:$0xff] %v2821
    %2830 = vst [vmem:[#allocation14 + $0x10] sm:$0xff] %v2822
    %2831 = vst [vmem:[#allocation14 + $0x18] sm:$0xff] %v2823
    %2832 = vst [vmem:[#allocation14 + $0x20] sm:$0xff] %v2824
    %2833 = vst [vmem:[#allocation14 + $0x28] sm:$0xff] %v2825
    %2834 = vst [vmem:[#allocation14 + $0x30] sm:$0xff] %v2826
    %2835 = vst [vmem:[#allocation14 + $0x38] sm:$0xff] %v2827
    // Predicated region
    $region94: #{tpu_custom_call.1} parent=1 // pred_check
      _
    $region95: #{tpu_custom_call.1} parent=1 // pred_check_branch
      %2837 = sbr.rel (0) target = $region97
    $region96: #{tpu_custom_call.1} parent=1 // pred_region
      %s2839 = ssub.s32 1024, 1024
      %2840 = vsyncadd [#allocation5], %s2839
      %s2841 = sshll.u32 [#allocation14], 4
      %s2842 = int_to_ptr.vmem [resolvable:$true] %s2841
      %2847 = dma.vmem_to_hbm [thread:$0]  %s2842, 1024, %s17, [#allocation5], 128, 128, 8
    $region97: #{tpu_custom_call.1} parent=1 // pred_fallthru
      _
    // Predicated region
    $region98: #{tpu_custom_call.1} parent=1 // pred_check
      _
    $region99: #{tpu_custom_call.1} parent=1 // pred_check_branch
      %2849 = sbr.rel (0) target = $region101
    $region100: #{tpu_custom_call.1} parent=1 // pred_region
      %2850 = dma.done [#allocation5], 1024
    $region101: #{tpu_custom_call.1} parent=1 // pred_fallthru
      _
    %2851 = vsyncpa [#allocation4], 1
    %2852 = vsyncpa [#allocation7], 1
    %2853 = vsyncpa [#allocation10], 1
    %2854 = vsyncpa [#allocation13], 1
    %2855 = vsyncpa [#allocation5], 1

</llo_original>
